<compile_context>
chip_gen: v6e
topology: v6e:2x2x1
jax: 0.10.0
libtpu: 0.0.40
codegen_flags: <defaults>
</compile_context>

<pallas_src>
import functools

import jax
import jax.numpy as jnp
from jax import lax
from jax.experimental import pallas as pl
from jax.experimental.pallas import tpu as pltpu


_TIME_CHUNK = 8   # timesteps per grid step; raise (32-64) for long sequences.


# ---------------------------------------------------------------------------
# Pallas kernel: one time-chunk of the fused bidirectional recurrence + LN.
# ---------------------------------------------------------------------------
def _make_kernel(seq_len, chunk, batch, hidden, needs_mask, mxu_dtype):
    H = hidden
    H4 = 4 * H
    B = batch
    Ts = chunk
    eps = 1e-5  # nn.LayerNorm default

    def kernel(gx_ref,        # (Ts*B, 8H)  streamed x-projection (+bias), mxu_dtype
               whh_hbm,       # (2, H, 4H)  recurrent weights, stays in HBM (ANY)
               ln_w_ref,      # (1, 2H) f32
               ln_b_ref,      # (1, 2H) f32
               out_ref,       # (Ts*B, 2H) f32   streamed output block
               hT_ref,        # (2, B, H) f32    VMEM-resident carried state / h_T
               cT_ref,        # (2, B, H) f32    VMEM-resident carried state / c_T
               whh_vmem,      # (2, H, 4H) scratch: single-buffered weights
               copy_sem):     # DMA semaphore for the one-time weight copy
        t = pl.program_id(0)

        # One-time setup: DMA the recurrent weights into VMEM (single-buffered)
        # and zero-init the carried state (held in the constant-index output
        # blocks, which stay resident in VMEM across the whole grid).
        @pl.when(t == 0)
        def _init():
            cp = pltpu.make_async_copy(whh_hbm, whh_vmem, copy_sem)
            cp.start()
            cp.wait()
            hT_ref[...] = jnp.zeros_like(hT_ref)
            cT_ref[...] = jnp.zeros_like(cT_ref)

        # Loop-invariant loads hoisted out of the serial time loop.
        w_f = whh_vmem[0]            # (H, 4H)  fwd: [Wh_i | Wh_f | Wh_o | Wh_c]
        w_b = whh_vmem[1]            # (H, 4H)  bwd
        ln_w = ln_w_ref[...]         # (1, 2H)
        ln_b = ln_b_ref[...]         # (1, 2H)

        h_f = hT_ref[0]              # (B, H)  f32
        h_b = hT_ref[1]
        c_f = cT_ref[0]
        c_b = cT_ref[1]

        chunk_base = t * Ts

        def step(s, carry):
            h_f, h_b, c_f, c_b = carry
            # Recurrent matmuls: bf16 (or f32) operands, f32 accumulation.
            rec_f = jnp.dot(h_f.astype(mxu_dtype), w_f,
                            preferred_element_type=jnp.float32)   # (B, 4H)
            rec_b = jnp.dot(h_b.astype(mxu_dtype), w_b,
                            preferred_element_type=jnp.float32)   # (B, 4H)
            gxs = gx_ref[pl.ds(s * B, B), :].astype(jnp.float32)  # (B, 8H)
            g_f = gxs[:, :H4] + rec_f     # [ i_f | f_f | o_f | c~_f ]
            g_b = gxs[:, H4:] + rec_b     # [ i_b | f_b | o_b | c~_b ]

            sig_f = jax.nn.sigmoid(g_f[:, :3 * H])
            sig_b = jax.nn.sigmoid(g_b[:, :3 * H])
            ct_f = jnp.tanh(g_f[:, 3 * H:])
            ct_b = jnp.tanh(g_b[:, 3 * H:])

            c_f_new = sig_f[:, H:2 * H] * c_f + sig_f[:, :H] * ct_f
            c_b_new = sig_b[:, H:2 * H] * c_b + sig_b[:, :H] * ct_b
            h_f_new = sig_f[:, 2 * H:] * jnp.tanh(c_f_new)
            h_b_new = sig_b[:, 2 * H:] * jnp.tanh(c_b_new)

            if needs_mask:
                valid = (chunk_base + s) < seq_len   # freeze state on pad steps
                h_f = jnp.where(valid, h_f_new, h_f)
                h_b = jnp.where(valid, h_b_new, h_b)
                c_f = jnp.where(valid, c_f_new, c_f)
                c_b = jnp.where(valid, c_b_new, c_b)
            else:
                h_f, h_b, c_f, c_b = h_f_new, h_b_new, c_f_new, c_b_new

            # Store only raw h; LayerNorm is deferred to the batched epilogue.
            out_ref[pl.ds(s * B, B), :] = jnp.concatenate([h_f, h_b], axis=-1)
            return (h_f, h_b, c_f, c_b)

        carry = (h_f, h_b, c_f, c_b)
        if Ts <= 16:
            # Small static chunk: full Python unroll (scheduler visibility).
            for s in range(Ts):
                carry = step(s, carry)
        else:
            # Large chunks: bounded live ranges / code size.
            carry = lax.fori_loop(0, Ts, step, carry, unroll=4)
        h_f, h_b, c_f, c_b = carry

        # Carry state to the next chunk; final grid step's value is (h_T, c_T).
        hT_ref[0] = h_f
        hT_ref[1] = h_b
        cT_ref[0] = c_f
        cT_ref[1] = c_b

        # Batched LayerNorm + one dense store over the whole chunk -- off the
        # serial critical path, overlaps with the next chunk's DMA.
        # TODO(synk): nn.Dropout(0.1) is identity at inference; not emitted.
        slab = out_ref[...]                                   # (Ts*B, 2H) f32
        mean = jnp.mean(slab, axis=-1, keepdims=True)
        diff = slab - mean
        var = jnp.mean(diff * diff, axis=-1, keepdims=True)
        out_ref[...] = diff * lax.rsqrt(var + eps) * ln_w + ln_b

    return kernel


# ---------------------------------------------------------------------------
# Weight packing: per-gate per-direction Linears -> fused MXU-friendly mats.
# Gate-axis layout (8H): [ i_f | f_f | o_f | c~_f | i_b | f_b | o_b | c~_b ].
# Recurrent weights stay per-direction as (2, H, 4H) (no zero block-diagonal).
# ---------------------------------------------------------------------------
def _pack_params(params, input_size, hidden_size):
    I = input_size
    gate_order = (("wi", "bi"), ("wf", "bf"), ("wo", "bo"), ("wc", "bc"))

    def pack_dir(p):
        wx = jnp.concatenate([p[w][:I] for w, _ in gate_order], axis=1)  # (I, 4H)
        wh = jnp.concatenate([p[w][I:] for w, _ in gate_order], axis=1)  # (H, 4H)
        b = jnp.concatenate([p[bn] for _, bn in gate_order])             # (4H,)
        return wx, wh, b

    wx_f, wh_f, b_f = pack_dir(params["fwd"])
    wx_b, wh_b, b_b = pack_dir(params["bwd"])
    wx = jnp.concatenate([wx_f, wx_b], axis=1)            # (I, 8H)
    b = jnp.concatenate([b_f, b_b])[None, :]              # (1, 8H)
    whh = jnp.stack([wh_f, wh_b], axis=0)                 # (2, H, 4H)
    ln_w = params["ln_w"][None, :].astype(jnp.float32)    # (1, 2H)
    ln_b = params["ln_b"][None, :].astype(jnp.float32)    # (1, 2H)
    return wx, b, whh, ln_w, ln_b


# ---------------------------------------------------------------------------
# Wrapper
# ---------------------------------------------------------------------------
@functools.partial(jax.jit, static_argnames=("mxu_dtype",))
def xlstm_block(x, params, *, mxu_dtype=jnp.bfloat16):
    """x: (B, S, I) f32. Returns (output (B,S,2H), (h_T (2,B,H), c_T (2,B,H)))."""
    B, S, I = x.shape
    H = params["fwd"]["wi"].shape[1]
    H2, G = 2 * H, 8 * H

    wx, bx, whh, ln_w, ln_b = _pack_params(params, I, H)
    whh = whh.astype(mxu_dtype)

    # Hoisted, time-parallel input projection for BOTH directions with biases
    # folded in: one big XLA matmul outside the recurrence. Stored time-major
    # and flattened to lane/sublane-dense (S*B, 8H) rows, streamed in
    # mxu_dtype (bf16 halves the dominant HBM stream).
    gx = (jnp.einsum("bsi,ig->sbg", x, wx) + bx).astype(mxu_dtype)
    gx = gx.reshape(S * B, G)

    Ts = min(_TIME_CHUNK, S)
    n_chunks = pl.cdiv(S, Ts)
    S_pad = n_chunks * Ts
    needs_mask = S_pad != S
    if needs_mask:
        gx = jnp.pad(gx, ((0, (S_pad - S) * B), (0, 0)))

    kernel = _make_kernel(S, Ts, B, H, needs_mask, mxu_dtype)

    grid_spec = pltpu.PrefetchScalarGridSpec(
        num_scalar_prefetch=0,
        grid=(n_chunks,),
        in_specs=[
            pl.BlockSpec((Ts * B, G), lambda t: (t, 0)),   # streamed gates_x
            pl.BlockSpec(memory_space=pl.ANY),             # whh: single-buffered
            pl.BlockSpec((1, H2), lambda t: (0, 0)),       # LN weight
            pl.BlockSpec((1, H2), lambda t: (0, 0)),       # LN bias
        ],
        out_specs=[
            pl.BlockSpec((Ts * B, H2), lambda t: (t, 0)),  # streamed output
            pl.BlockSpec((2, B, H), lambda t: (0, 0, 0)),  # carried / final h
            pl.BlockSpec((2, B, H), lambda t: (0, 0, 0)),  # carried / final c
        ],
        scratch_shapes=[
            pltpu.VMEM((2, H, 4 * H), mxu_dtype),          # resident Whh
            pltpu.SemaphoreType.DMA,                       # weight-copy sem
        ],
    )

    out_shapes = (
        jax.ShapeDtypeStruct((S_pad * B, H2), jnp.float32),
        jax.ShapeDtypeStruct((2, B, H), jnp.float32),
        jax.ShapeDtypeStruct((2, B, H), jnp.float32),
    )

    out_flat, h_T, c_T = pl.pallas_call(
        kernel,
        grid_spec=grid_spec,
        out_shape=out_shapes,
        compiler_params=pltpu.CompilerParams(
            dimension_semantics=("arbitrary",),            # serial time axis
            vmem_limit_bytes=32 * 1024 * 1024,
        ),
    )(gx, whh, ln_w, ln_b)

    # Back to batch-first for the module's interface. A time-major consumer
    # should take out_flat directly (the reshape is free; this transpose is
    # the one remaining extra HBM pass).
    output = out_flat.reshape(S_pad, B, H2)[:S].transpose(1, 0, 2)
    return output, (h_T, c_T)


# ---------------------------------------------------------------------------
# Deterministic parameters (per-gate Linears, like the PyTorch sLSTMCell).
# ---------------------------------------------------------------------------
def init_params(key, input_size, hidden_size):
    I, H = input_size, hidden_size
    fan_in = I + H
    bound = 1.0 / (fan_in ** 0.5)

    def one_direction(k):
        ks = jax.random.split(k, 8)

        def lin(kw, kb):
            w = jax.random.uniform(kw, (fan_in, H), jnp.float32, -bound, bound)
            b = jax.random.uniform(kb, (H,), jnp.float32, -bound, bound)
            return w, b

        wi, bi = lin(ks[0], ks[1])
        wf, bf = lin(ks[2], ks[3])
        wc, bc = lin(ks[4], ks[5])
        wo, bo = lin(ks[6], ks[7])
        return {"wi": wi, "bi": bi, "wf": wf, "bf": bf,
                "wc": wc, "bc": bc, "wo": wo, "bo": bo}

    k_f, k_b = jax.random.split(key)
    return {
        "fwd": one_direction(k_f),
        "bwd": one_direction(k_b),
        "ln_w": jnp.ones((2 * H,), jnp.float32),   # nn.LayerNorm defaults
        "ln_b": jnp.zeros((2 * H,), jnp.float32),
    }


# ---------------------------------------------------------------------------
# Pure-JAX reference (direct transcription of the PyTorch cell / block).
# ---------------------------------------------------------------------------
def reference_forward(x, params):
    B, S, I = x.shape
    H = params["fwd"]["wi"].shape[1]
    eps = 1e-5

    def cell(p, x_t, h, c):
        comb = jnp.concatenate([x_t, h], axis=1)
        i = jax.nn.sigmoid(comb @ p["wi"] + p["bi"])
        f = jax.nn.sigmoid(comb @ p["wf"] + p["bf"])
        c_tilde = jnp.tanh(comb @ p["wc"] + p["bc"])
        o = jax.nn.sigmoid(comb @ p["wo"] + p["bo"])
        c = f * c + i * c_tilde
        h = o * jnp.tanh(c)
        return h, c

    h_f = jnp.zeros((B, H)); c_f = jnp.zeros((B, H))
    h_b = jnp.zeros((B, H)); c_b = jnp.zeros((B, H))
    outs = []
    for t in range(S):
        x_t = x[:, t, :]
        h_f, c_f = cell(params["fwd"], x_t, h_f, c_f)
        h_b, c_b = cell(params["bwd"], x_t, h_b, c_b)
        o = jnp.concatenate([h_f, h_b], axis=1)
        m = o.mean(-1, keepdims=True)
        v = ((o - m) ** 2).mean(-1, keepdims=True)
        outs.append((o - m) / jnp.sqrt(v + eps) * params["ln_w"] + params["ln_b"])
    output = jnp.stack(outs, axis=1)
    return output, (jnp.stack([h_f, h_b]), jnp.stack([c_f, c_b]))


if __name__ == "__main__":
    input_size = 4     # features F1..F4 in the reference script
    hidden_size = 16
    batch = 2
    seq = 16           # two time-chunks -> exercises the carried-state grid

    key = jax.random.PRNGKey(0)
    k_x, k_p = jax.random.split(key)
    x = jax.random.normal(k_x, (batch, seq, input_size), jnp.float32)
    params = init_params(k_p, input_size, hidden_size)

    ref_out, (ref_h, ref_c) = reference_forward(x, params)

    # 1) f32 MXU path: tight check against the pure-JAX reference.
    out, (h_T, c_T) = xlstm_block(x, params, mxu_dtype=jnp.float32)
    out, h_T, c_T = jax.block_until_ready((out, h_T, c_T))
    assert out.shape == (batch, seq, 2 * hidden_size)
    assert h_T.shape == (2, batch, hidden_size)
    assert c_T.shape == (2, batch, hidden_size)
    assert jnp.allclose(out, ref_out, atol=1e-4, rtol=1e-4)
    assert jnp.allclose(h_T, ref_h, atol=1e-4, rtol=1e-4)
    assert jnp.allclose(c_T, ref_c, atol=1e-4, rtol=1e-4)

    # 2) bf16 MXU path (production setting on v6e/v7x): looser tolerance.
    out16, (h16, c16) = xlstm_block(x, params, mxu_dtype=jnp.bfloat16)
    out16, h16, c16 = jax.block_until_ready((out16, h16, c16))
    assert jnp.allclose(out16, ref_out, atol=8e-2, rtol=8e-2)
    assert jnp.allclose(h16, ref_h, atol=8e-2, rtol=8e-2)
    assert jnp.allclose(c16, ref_c, atol=8e-2, rtol=8e-2)

    # 3) Non-multiple sequence length -> padded grid + per-step state masking.
    x_odd = x[:, :13]
    ref_out_o, (ref_h_o, ref_c_o) = reference_forward(x_odd, params)
    out_o, (h_o, c_o) = xlstm_block(x_odd, params, mxu_dtype=jnp.float32)
    out_o, h_o, c_o = jax.block_until_ready((out_o, h_o, c_o))
    assert out_o.shape == (batch, 13, 2 * hidden_size)
    assert jnp.allclose(out_o, ref_out_o, atol=1e-4, rtol=1e-4)
    assert jnp.allclose(h_o, ref_h_o, atol=1e-4, rtol=1e-4)
    assert jnp.allclose(c_o, ref_c_o, atol=1e-4, rtol=1e-4)

    print("KERNEL_OK")
</pallas_src>

<mosaic_0001>
module attributes {stable_mosaic.version = 11 : i64} {
  func.func @kernel(%arg0: i32, %arg1: memref<16x128xf32, #tpu.memory_space<vmem>>, %arg2: memref<2x16x64xf32, #tpu.memory_space<any>>, %arg3: memref<1x32xf32, #tpu.memory_space<vmem>>, %arg4: memref<1x32xf32, #tpu.memory_space<vmem>>, %arg5: memref<16x32xf32, #tpu.memory_space<vmem>>, %arg6: memref<2x2x16xf32, #tpu.memory_space<vmem>>, %arg7: memref<2x2x16xf32, #tpu.memory_space<vmem>>, %arg8: memref<2x16x64xf32, #tpu.memory_space<vmem>>, %arg9: memref<!tpu.dma_semaphore, #tpu.memory_space<semaphore_mem>>) attributes {dimension_semantics = [#tpu.dimension_semantics<arbitrary>], iteration_bounds = array<i64: 2>, scalar_prefetch = 0 : i64, scratch_operands = 2 : i64, tpu.core_type = #tpu.core_type<tc>, window_params = [{transform_indices = @transform_0, window_bounds = array<i64: 16, 128>}, {}, {pipeline_mode = #tpu.pipeline_mode<synchronous>, transform_indices = @transform_2, window_bounds = array<i64: 1, 32>}, {pipeline_mode = #tpu.pipeline_mode<synchronous>, transform_indices = @transform_3, window_bounds = array<i64: 1, 32>}, {transform_indices = @transform_4, window_bounds = array<i64: 16, 32>}, {pipeline_mode = #tpu.pipeline_mode<synchronous>, transform_indices = @transform_5, window_bounds = array<i64: 2, 2, 16>}, {pipeline_mode = #tpu.pipeline_mode<synchronous>, transform_indices = @transform_6, window_bounds = array<i64: 2, 2, 16>}]} {
    %c0_i32 = arith.constant 0 : i32
    %0 = arith.cmpi eq, %arg0, %c0_i32 : i32
    %1 = arith.extui %0 : i1 to i32
    %c0_i32_0 = arith.constant 0 : i32
    %2 = arith.cmpi ne, %1, %c0_i32_0 : i32
    scf.if %2 {
      tpu.enqueue_dma source(%arg2 : memref<2x16x64xf32, #tpu.memory_space<any>>) target(%arg8 : memref<2x16x64xf32, #tpu.memory_space<vmem>>) target_semaphore(%arg9 : memref<!tpu.dma_semaphore, #tpu.memory_space<semaphore_mem>>)
      tpu.wait_dma2 semaphore(%arg9 : memref<!tpu.dma_semaphore, #tpu.memory_space<semaphore_mem>>) src(%arg2 : memref<2x16x64xf32, #tpu.memory_space<any>>) dst(%arg8 : memref<2x16x64xf32, #tpu.memory_space<vmem>>)
      %cst_98 = arith.constant 0.000000e+00 : f32
      %379 = vector.broadcast %cst_98 : f32 to vector<2x2x16xf32>
      %c0_99 = arith.constant 0 : index
      %c0_100 = arith.constant 0 : index
      %c0_101 = arith.constant 0 : index
      %380 = vector.load %arg6[%c0_99, %c0_100, %c0_101] : memref<2x2x16xf32, #tpu.memory_space<vmem>>, vector<2x2x16xf32>
      tpu.vector_store %arg6[%c0_99, %c0_100, %c0_101], %379 {strides = array<i32>} : memref<2x2x16xf32, #tpu.memory_space<vmem>>, vector<2x2x16xf32>,
      %cst_102 = arith.constant 0.000000e+00 : f32
      %381 = vector.broadcast %cst_102 : f32 to vector<2x2x16xf32>
      %c0_103 = arith.constant 0 : index
      %c0_104 = arith.constant 0 : index
      %c0_105 = arith.constant 0 : index
      %382 = vector.load %arg7[%c0_103, %c0_104, %c0_105] : memref<2x2x16xf32, #tpu.memory_space<vmem>>, vector<2x2x16xf32>
      tpu.vector_store %arg7[%c0_103, %c0_104, %c0_105], %381 {strides = array<i32>} : memref<2x2x16xf32, #tpu.memory_space<vmem>>, vector<2x2x16xf32>,
    } else {
    }
    %c0 = arith.constant 0 : index
    %c0_1 = arith.constant 0 : index
    %c0_2 = arith.constant 0 : index
    %3 = vector.load %arg8[%c0, %c0_1, %c0_2] : memref<2x16x64xf32, #tpu.memory_space<vmem>>, vector<1x16x64xf32>
    %4 = vector.shape_cast %3 : vector<1x16x64xf32> to vector<16x64xf32>
    %c1 = arith.constant 1 : index
    %c0_3 = arith.constant 0 : index
    %c0_4 = arith.constant 0 : index
    %5 = vector.load %arg8[%c1, %c0_3, %c0_4] : memref<2x16x64xf32, #tpu.memory_space<vmem>>, vector<1x16x64xf32>
    %6 = vector.shape_cast %5 : vector<1x16x64xf32> to vector<16x64xf32>
    %c0_5 = arith.constant 0 : index
    %c0_6 = arith.constant 0 : index
    %7 = vector.load %arg3[%c0_5, %c0_6] : memref<1x32xf32, #tpu.memory_space<vmem>>, vector<1x32xf32>
    %c0_7 = arith.constant 0 : index
    %c0_8 = arith.constant 0 : index
    %8 = vector.load %arg4[%c0_7, %c0_8] : memref<1x32xf32, #tpu.memory_space<vmem>>, vector<1x32xf32>
    %c0_9 = arith.constant 0 : index
    %c0_10 = arith.constant 0 : index
    %c0_11 = arith.constant 0 : index
    %9 = vector.load %arg6[%c0_9, %c0_10, %c0_11] : memref<2x2x16xf32, #tpu.memory_space<vmem>>, vector<1x2x16xf32>
    %10 = vector.shape_cast %9 : vector<1x2x16xf32> to vector<2x16xf32>
    %c1_12 = arith.constant 1 : index
    %c0_13 = arith.constant 0 : index
    %c0_14 = arith.constant 0 : index
    %11 = vector.load %arg6[%c1_12, %c0_13, %c0_14] : memref<2x2x16xf32, #tpu.memory_space<vmem>>, vector<1x2x16xf32>
    %12 = vector.shape_cast %11 : vector<1x2x16xf32> to vector<2x16xf32>
    %c0_15 = arith.constant 0 : index
    %c0_16 = arith.constant 0 : index
    %c0_17 = arith.constant 0 : index
    %13 = vector.load %arg7[%c0_15, %c0_16, %c0_17] : memref<2x2x16xf32, #tpu.memory_space<vmem>>, vector<1x2x16xf32>
    %14 = vector.shape_cast %13 : vector<1x2x16xf32> to vector<2x16xf32>
    %c1_18 = arith.constant 1 : index
    %c0_19 = arith.constant 0 : index
    %c0_20 = arith.constant 0 : index
    %15 = vector.load %arg7[%c1_18, %c0_19, %c0_20] : memref<2x2x16xf32, #tpu.memory_space<vmem>>, vector<1x2x16xf32>
    %16 = vector.shape_cast %15 : vector<1x2x16xf32> to vector<2x16xf32>
    %cst = arith.constant dense<0.000000e+00> : vector<2x64xf32>
    %17 = tpu.matmul %10, %4, %cst {dimension_numbers = #tpu.dot_dimension_numbers<[1], [0], [0], [1], [0, 0, 1, 1], [], []>} : vector<2x16xf32>, vector<16x64xf32>, vector<2x64xf32> -> vector<2x64xf32>
    %cst_21 = arith.constant dense<0.000000e+00> : vector<2x64xf32>
    %18 = tpu.matmul %12, %6, %cst_21 {dimension_numbers = #tpu.dot_dimension_numbers<[1], [0], [0], [1], [0, 0, 1, 1], [], []>} : vector<2x16xf32>, vector<16x64xf32>, vector<2x64xf32> -> vector<2x64xf32>
    %c0_22 = arith.constant 0 : index
    %c0_23 = arith.constant 0 : index
    %19 = vector.load %arg1[%c0_22, %c0_23] : memref<16x128xf32, #tpu.memory_space<vmem>>, vector<2x128xf32>
    %20 = vector.extract_strided_slice %19 {offsets = [0, 0], sizes = [2, 64], strides = [1, 1]} : vector<2x128xf32> to vector<2x64xf32>
    %21 = arith.addf %20, %17 : vector<2x64xf32>
    %22 = vector.extract_strided_slice %19 {offsets = [0, 64], sizes = [2, 64], strides = [1, 1]} : vector<2x128xf32> to vector<2x64xf32>
    %23 = arith.addf %22, %18 : vector<2x64xf32>
    %24 = vector.extract_strided_slice %21 {offsets = [0, 0], sizes = [2, 48], strides = [1, 1]} : vector<2x64xf32> to vector<2x48xf32>
    %25 = arith.negf %24 : vector<2x48xf32>
    %26 = math.exp %25 : vector<2x48xf32>
    %cst_24 = arith.constant 1.000000e+00 : f32
    %27 = vector.broadcast %cst_24 : f32 to vector<2x48xf32>
    %28 = arith.addf %27, %26 : vector<2x48xf32>
    %29 = arith.divf %27, %28 : vector<2x48xf32>
    %30 = vector.extract_strided_slice %23 {offsets = [0, 0], sizes = [2, 48], strides = [1, 1]} : vector<2x64xf32> to vector<2x48xf32>
    %31 = arith.negf %30 : vector<2x48xf32>
    %32 = math.exp %31 : vector<2x48xf32>
    %cst_25 = arith.constant 1.000000e+00 : f32
    %33 = vector.broadcast %cst_25 : f32 to vector<2x48xf32>
    %34 = arith.addf %33, %32 : vector<2x48xf32>
    %35 = arith.divf %33, %34 : vector<2x48xf32>
    %36 = vector.extract_strided_slice %21 {offsets = [0, 48], sizes = [2, 16], strides = [1, 1]} : vector<2x64xf32> to vector<2x16xf32>
    %37 = math.tanh %36 : vector<2x16xf32>
    %38 = vector.extract_strided_slice %23 {offsets = [0, 48], sizes = [2, 16], strides = [1, 1]} : vector<2x64xf32> to vector<2x16xf32>
    %39 = math.tanh %38 : vector<2x16xf32>
    %40 = vector.extract_strided_slice %29 {offsets = [0, 16], sizes = [2, 16], strides = [1, 1]} : vector<2x48xf32> to vector<2x16xf32>
    %41 = arith.mulf %40, %14 : vector<2x16xf32>
    %42 = vector.extract_strided_slice %29 {offsets = [0, 0], sizes = [2, 16], strides = [1, 1]} : vector<2x48xf32> to vector<2x16xf32>
    %43 = arith.mulf %42, %37 : vector<2x16xf32>
    %44 = arith.addf %41, %43 : vector<2x16xf32>
    %45 = vector.extract_strided_slice %35 {offsets = [0, 16], sizes = [2, 16], strides = [1, 1]} : vector<2x48xf32> to vector<2x16xf32>
    %46 = arith.mulf %45, %16 : vector<2x16xf32>
    %47 = vector.extract_strided_slice %35 {offsets = [0, 0], sizes = [2, 16], strides = [1, 1]} : vector<2x48xf32> to vector<2x16xf32>
    %48 = arith.mulf %47, %39 : vector<2x16xf32>
    %49 = arith.addf %46, %48 : vector<2x16xf32>
    %50 = vector.extract_strided_slice %29 {offsets = [0, 32], sizes = [2, 16], strides = [1, 1]} : vector<2x48xf32> to vector<2x16xf32>
    %51 = math.tanh %44 : vector<2x16xf32>
    %52 = arith.mulf %50, %51 : vector<2x16xf32>
    %53 = vector.extract_strided_slice %35 {offsets = [0, 32], sizes = [2, 16], strides = [1, 1]} : vector<2x48xf32> to vector<2x16xf32>
    %54 = math.tanh %49 : vector<2x16xf32>
    %55 = arith.mulf %53, %54 : vector<2x16xf32>
    %56 = tpu.concatenate %52, %55 in 1 : vector<2x16xf32>, vector<2x16xf32> -> vector<2x32xf32>
    %c0_26 = arith.constant 0 : index
    %c0_27 = arith.constant 0 : index
    %57 = vector.load %arg5[%c0_26, %c0_27] : memref<16x32xf32, #tpu.memory_space<vmem>>, vector<2x32xf32>
    tpu.vector_store %arg5[%c0_26, %c0_27], %56 {strides = array<i32>} : memref<16x32xf32, #tpu.memory_space<vmem>>, vector<2x32xf32>,
    %cst_28 = arith.constant dense<0.000000e+00> : vector<2x64xf32>
    %58 = tpu.matmul %52, %4, %cst_28 {dimension_numbers = #tpu.dot_dimension_numbers<[1], [0], [0], [1], [0, 0, 1, 1], [], []>} : vector<2x16xf32>, vector<16x64xf32>, vector<2x64xf32> -> vector<2x64xf32>
    %cst_29 = arith.constant dense<0.000000e+00> : vector<2x64xf32>
    %59 = tpu.matmul %55, %6, %cst_29 {dimension_numbers = #tpu.dot_dimension_numbers<[1], [0], [0], [1], [0, 0, 1, 1], [], []>} : vector<2x16xf32>, vector<16x64xf32>, vector<2x64xf32> -> vector<2x64xf32>
    %c2 = arith.constant 2 : index
    %c0_30 = arith.constant 0 : index
    %60 = vector.load %arg1[%c2, %c0_30] : memref<16x128xf32, #tpu.memory_space<vmem>>, vector<2x128xf32>
    %61 = vector.extract_strided_slice %60 {offsets = [0, 0], sizes = [2, 64], strides = [1, 1]} : vector<2x128xf32> to vector<2x64xf32>
    %62 = arith.addf %61, %58 : vector<2x64xf32>
    %63 = vector.extract_strided_slice %60 {offsets = [0, 64], sizes = [2, 64], strides = [1, 1]} : vector<2x128xf32> to vector<2x64xf32>
    %64 = arith.addf %63, %59 : vector<2x64xf32>
    %65 = vector.extract_strided_slice %62 {offsets = [0, 0], sizes = [2, 48], strides = [1, 1]} : vector<2x64xf32> to vector<2x48xf32>
    %66 = arith.negf %65 : vector<2x48xf32>
    %67 = math.exp %66 : vector<2x48xf32>
    %cst_31 = arith.constant 1.000000e+00 : f32
    %68 = vector.broadcast %cst_31 : f32 to vector<2x48xf32>
    %69 = arith.addf %68, %67 : vector<2x48xf32>
    %70 = arith.divf %68, %69 : vector<2x48xf32>
    %71 = vector.extract_strided_slice %64 {offsets = [0, 0], sizes = [2, 48], strides = [1, 1]} : vector<2x64xf32> to vector<2x48xf32>
    %72 = arith.negf %71 : vector<2x48xf32>
    %73 = math.exp %72 : vector<2x48xf32>
    %cst_32 = arith.constant 1.000000e+00 : f32
    %74 = vector.broadcast %cst_32 : f32 to vector<2x48xf32>
    %75 = arith.addf %74, %73 : vector<2x48xf32>
    %76 = arith.divf %74, %75 : vector<2x48xf32>
    %77 = vector.extract_strided_slice %62 {offsets = [0, 48], sizes = [2, 16], strides = [1, 1]} : vector<2x64xf32> to vector<2x16xf32>
    %78 = math.tanh %77 : vector<2x16xf32>
    %79 = vector.extract_strided_slice %64 {offsets = [0, 48], sizes = [2, 16], strides = [1, 1]} : vector<2x64xf32> to vector<2x16xf32>
    %80 = math.tanh %79 : vector<2x16xf32>
    %81 = vector.extract_strided_slice %70 {offsets = [0, 16], sizes = [2, 16], strides = [1, 1]} : vector<2x48xf32> to vector<2x16xf32>
    %82 = arith.mulf %81, %44 : vector<2x16xf32>
    %83 = vector.extract_strided_slice %70 {offsets = [0, 0], sizes = [2, 16], strides = [1, 1]} : vector<2x48xf32> to vector<2x16xf32>
    %84 = arith.mulf %83, %78 : vector<2x16xf32>
    %85 = arith.addf %82, %84 : vector<2x16xf32>
    %86 = vector.extract_strided_slice %76 {offsets = [0, 16], sizes = [2, 16], strides = [1, 1]} : vector<2x48xf32> to vector<2x16xf32>
    %87 = arith.mulf %86, %49 : vector<2x16xf32>
    %88 = vector.extract_strided_slice %76 {offsets = [0, 0], sizes = [2, 16], strides = [1, 1]} : vector<2x48xf32> to vector<2x16xf32>
    %89 = arith.mulf %88, %80 : vector<2x16xf32>
    %90 = arith.addf %87, %89 : vector<2x16xf32>
    %91 = vector.extract_strided_slice %70 {offsets = [0, 32], sizes = [2, 16], strides = [1, 1]} : vector<2x48xf32> to vector<2x16xf32>
    %92 = math.tanh %85 : vector<2x16xf32>
    %93 = arith.mulf %91, %92 : vector<2x16xf32>
    %94 = vector.extract_strided_slice %76 {offsets = [0, 32], sizes = [2, 16], strides = [1, 1]} : vector<2x48xf32> to vector<2x16xf32>
    %95 = math.tanh %90 : vector<2x16xf32>
    %96 = arith.mulf %94, %95 : vector<2x16xf32>
    %97 = tpu.concatenate %93, %96 in 1 : vector<2x16xf32>, vector<2x16xf32> -> vector<2x32xf32>
    %c2_33 = arith.constant 2 : index
    %c0_34 = arith.constant 0 : index
    %98 = vector.load %arg5[%c2_33, %c0_34] : memref<16x32xf32, #tpu.memory_space<vmem>>, vector<2x32xf32>
    tpu.vector_store %arg5[%c2_33, %c0_34], %97 {strides = array<i32>} : memref<16x32xf32, #tpu.memory_space<vmem>>, vector<2x32xf32>,
    %cst_35 = arith.constant dense<0.000000e+00> : vector<2x64xf32>
    %99 = tpu.matmul %93, %4, %cst_35 {dimension_numbers = #tpu.dot_dimension_numbers<[1], [0], [0], [1], [0, 0, 1, 1], [], []>} : vector<2x16xf32>, vector<16x64xf32>, vector<2x64xf32> -> vector<2x64xf32>
    %cst_36 = arith.constant dense<0.000000e+00> : vector<2x64xf32>
    %100 = tpu.matmul %96, %6, %cst_36 {dimension_numbers = #tpu.dot_dimension_numbers<[1], [0], [0], [1], [0, 0, 1, 1], [], []>} : vector<2x16xf32>, vector<16x64xf32>, vector<2x64xf32> -> vector<2x64xf32>
    %c4 = arith.constant 4 : index
    %c0_37 = arith.constant 0 : index
    %101 = vector.load %arg1[%c4, %c0_37] : memref<16x128xf32, #tpu.memory_space<vmem>>, vector<2x128xf32>
    %102 = vector.extract_strided_slice %101 {offsets = [0, 0], sizes = [2, 64], strides = [1, 1]} : vector<2x128xf32> to vector<2x64xf32>
    %103 = arith.addf %102, %99 : vector<2x64xf32>
    %104 = vector.extract_strided_slice %101 {offsets = [0, 64], sizes = [2, 64], strides = [1, 1]} : vector<2x128xf32> to vector<2x64xf32>
    %105 = arith.addf %104, %100 : vector<2x64xf32>
    %106 = vector.extract_strided_slice %103 {offsets = [0, 0], sizes = [2, 48], strides = [1, 1]} : vector<2x64xf32> to vector<2x48xf32>
    %107 = arith.negf %106 : vector<2x48xf32>
    %108 = math.exp %107 : vector<2x48xf32>
    %cst_38 = arith.constant 1.000000e+00 : f32
    %109 = vector.broadcast %cst_38 : f32 to vector<2x48xf32>
    %110 = arith.addf %109, %108 : vector<2x48xf32>
    %111 = arith.divf %109, %110 : vector<2x48xf32>
    %112 = vector.extract_strided_slice %105 {offsets = [0, 0], sizes = [2, 48], strides = [1, 1]} : vector<2x64xf32> to vector<2x48xf32>
    %113 = arith.negf %112 : vector<2x48xf32>
    %114 = math.exp %113 : vector<2x48xf32>
    %cst_39 = arith.constant 1.000000e+00 : f32
    %115 = vector.broadcast %cst_39 : f32 to vector<2x48xf32>
    %116 = arith.addf %115, %114 : vector<2x48xf32>
    %117 = arith.divf %115, %116 : vector<2x48xf32>
    %118 = vector.extract_strided_slice %103 {offsets = [0, 48], sizes = [2, 16], strides = [1, 1]} : vector<2x64xf32> to vector<2x16xf32>
    %119 = math.tanh %118 : vector<2x16xf32>
    %120 = vector.extract_strided_slice %105 {offsets = [0, 48], sizes = [2, 16], strides = [1, 1]} : vector<2x64xf32> to vector<2x16xf32>
    %121 = math.tanh %120 : vector<2x16xf32>
    %122 = vector.extract_strided_slice %111 {offsets = [0, 16], sizes = [2, 16], strides = [1, 1]} : vector<2x48xf32> to vector<2x16xf32>
    %123 = arith.mulf %122, %85 : vector<2x16xf32>
    %124 = vector.extract_strided_slice %111 {offsets = [0, 0], sizes = [2, 16], strides = [1, 1]} : vector<2x48xf32> to vector<2x16xf32>
    %125 = arith.mulf %124, %119 : vector<2x16xf32>
    %126 = arith.addf %123, %125 : vector<2x16xf32>
    %127 = vector.extract_strided_slice %117 {offsets = [0, 16], sizes = [2, 16], strides = [1, 1]} : vector<2x48xf32> to vector<2x16xf32>
    %128 = arith.mulf %127, %90 : vector<2x16xf32>
    %129 = vector.extract_strided_slice %117 {offsets = [0, 0], sizes = [2, 16], strides = [1, 1]} : vector<2x48xf32> to vector<2x16xf32>
    %130 = arith.mulf %129, %121 : vector<2x16xf32>
    %131 = arith.addf %128, %130 : vector<2x16xf32>
    %132 = vector.extract_strided_slice %111 {offsets = [0, 32], sizes = [2, 16], strides = [1, 1]} : vector<2x48xf32> to vector<2x16xf32>
    %133 = math.tanh %126 : vector<2x16xf32>
    %134 = arith.mulf %132, %133 : vector<2x16xf32>
    %135 = vector.extract_strided_slice %117 {offsets = [0, 32], sizes = [2, 16], strides = [1, 1]} : vector<2x48xf32> to vector<2x16xf32>
    %136 = math.tanh %131 : vector<2x16xf32>
    %137 = arith.mulf %135, %136 : vector<2x16xf32>
    %138 = tpu.concatenate %134, %137 in 1 : vector<2x16xf32>, vector<2x16xf32> -> vector<2x32xf32>
    %c4_40 = arith.constant 4 : index
    %c0_41 = arith.constant 0 : index
    %139 = vector.load %arg5[%c4_40, %c0_41] : memref<16x32xf32, #tpu.memory_space<vmem>>, vector<2x32xf32>
    tpu.vector_store %arg5[%c4_40, %c0_41], %138 {strides = array<i32>} : memref<16x32xf32, #tpu.memory_space<vmem>>, vector<2x32xf32>,
    %cst_42 = arith.constant dense<0.000000e+00> : vector<2x64xf32>
    %140 = tpu.matmul %134, %4, %cst_42 {dimension_numbers = #tpu.dot_dimension_numbers<[1], [0], [0], [1], [0, 0, 1, 1], [], []>} : vector<2x16xf32>, vector<16x64xf32>, vector<2x64xf32> -> vector<2x64xf32>
    %cst_43 = arith.constant dense<0.000000e+00> : vector<2x64xf32>
    %141 = tpu.matmul %137, %6, %cst_43 {dimension_numbers = #tpu.dot_dimension_numbers<[1], [0], [0], [1], [0, 0, 1, 1], [], []>} : vector<2x16xf32>, vector<16x64xf32>, vector<2x64xf32> -> vector<2x64xf32>
    %c6 = arith.constant 6 : index
    %c0_44 = arith.constant 0 : index
    %142 = vector.load %arg1[%c6, %c0_44] : memref<16x128xf32, #tpu.memory_space<vmem>>, vector<2x128xf32>
    %143 = vector.extract_strided_slice %142 {offsets = [0, 0], sizes = [2, 64], strides = [1, 1]} : vector<2x128xf32> to vector<2x64xf32>
    %144 = arith.addf %143, %140 : vector<2x64xf32>
    %145 = vector.extract_strided_slice %142 {offsets = [0, 64], sizes = [2, 64], strides = [1, 1]} : vector<2x128xf32> to vector<2x64xf32>
    %146 = arith.addf %145, %141 : vector<2x64xf32>
    %147 = vector.extract_strided_slice %144 {offsets = [0, 0], sizes = [2, 48], strides = [1, 1]} : vector<2x64xf32> to vector<2x48xf32>
    %148 = arith.negf %147 : vector<2x48xf32>
    %149 = math.exp %148 : vector<2x48xf32>
    %cst_45 = arith.constant 1.000000e+00 : f32
    %150 = vector.broadcast %cst_45 : f32 to vector<2x48xf32>
    %151 = arith.addf %150, %149 : vector<2x48xf32>
    %152 = arith.divf %150, %151 : vector<2x48xf32>
    %153 = vector.extract_strided_slice %146 {offsets = [0, 0], sizes = [2, 48], strides = [1, 1]} : vector<2x64xf32> to vector<2x48xf32>
    %154 = arith.negf %153 : vector<2x48xf32>
    %155 = math.exp %154 : vector<2x48xf32>
    %cst_46 = arith.constant 1.000000e+00 : f32
    %156 = vector.broadcast %cst_46 : f32 to vector<2x48xf32>
    %157 = arith.addf %156, %155 : vector<2x48xf32>
    %158 = arith.divf %156, %157 : vector<2x48xf32>
    %159 = vector.extract_strided_slice %144 {offsets = [0, 48], sizes = [2, 16], strides = [1, 1]} : vector<2x64xf32> to vector<2x16xf32>
    %160 = math.tanh %159 : vector<2x16xf32>
    %161 = vector.extract_strided_slice %146 {offsets = [0, 48], sizes = [2, 16], strides = [1, 1]} : vector<2x64xf32> to vector<2x16xf32>
    %162 = math.tanh %161 : vector<2x16xf32>
    %163 = vector.extract_strided_slice %152 {offsets = [0, 16], sizes = [2, 16], strides = [1, 1]} : vector<2x48xf32> to vector<2x16xf32>
    %164 = arith.mulf %163, %126 : vector<2x16xf32>
    %165 = vector.extract_strided_slice %152 {offsets = [0, 0], sizes = [2, 16], strides = [1, 1]} : vector<2x48xf32> to vector<2x16xf32>
    %166 = arith.mulf %165, %160 : vector<2x16xf32>
    %167 = arith.addf %164, %166 : vector<2x16xf32>
    %168 = vector.extract_strided_slice %158 {offsets = [0, 16], sizes = [2, 16], strides = [1, 1]} : vector<2x48xf32> to vector<2x16xf32>
    %169 = arith.mulf %168, %131 : vector<2x16xf32>
    %170 = vector.extract_strided_slice %158 {offsets = [0, 0], sizes = [2, 16], strides = [1, 1]} : vector<2x48xf32> to vector<2x16xf32>
    %171 = arith.mulf %170, %162 : vector<2x16xf32>
    %172 = arith.addf %169, %171 : vector<2x16xf32>
    %173 = vector.extract_strided_slice %152 {offsets = [0, 32], sizes = [2, 16], strides = [1, 1]} : vector<2x48xf32> to vector<2x16xf32>
    %174 = math.tanh %167 : vector<2x16xf32>
    %175 = arith.mulf %173, %174 : vector<2x16xf32>
    %176 = vector.extract_strided_slice %158 {offsets = [0, 32], sizes = [2, 16], strides = [1, 1]} : vector<2x48xf32> to vector<2x16xf32>
    %177 = math.tanh %172 : vector<2x16xf32>
    %178 = arith.mulf %176, %177 : vector<2x16xf32>
    %179 = tpu.concatenate %175, %178 in 1 : vector<2x16xf32>, vector<2x16xf32> -> vector<2x32xf32>
    %c6_47 = arith.constant 6 : index
    %c0_48 = arith.constant 0 : index
    %180 = vector.load %arg5[%c6_47, %c0_48] : memref<16x32xf32, #tpu.memory_space<vmem>>, vector<2x32xf32>
    tpu.vector_store %arg5[%c6_47, %c0_48], %179 {strides = array<i32>} : memref<16x32xf32, #tpu.memory_space<vmem>>, vector<2x32xf32>,
    %cst_49 = arith.constant dense<0.000000e+00> : vector<2x64xf32>
    %181 = tpu.matmul %175, %4, %cst_49 {dimension_numbers = #tpu.dot_dimension_numbers<[1], [0], [0], [1], [0, 0, 1, 1], [], []>} : vector<2x16xf32>, vector<16x64xf32>, vector<2x64xf32> -> vector<2x64xf32>
    %cst_50 = arith.constant dense<0.000000e+00> : vector<2x64xf32>
    %182 = tpu.matmul %178, %6, %cst_50 {dimension_numbers = #tpu.dot_dimension_numbers<[1], [0], [0], [1], [0, 0, 1, 1], [], []>} : vector<2x16xf32>, vector<16x64xf32>, vector<2x64xf32> -> vector<2x64xf32>
    %c8 = arith.constant 8 : index
    %c0_51 = arith.constant 0 : index
    %183 = vector.load %arg1[%c8, %c0_51] : memref<16x128xf32, #tpu.memory_space<vmem>>, vector<2x128xf32>
    %184 = vector.extract_strided_slice %183 {offsets = [0, 0], sizes = [2, 64], strides = [1, 1]} : vector<2x128xf32> to vector<2x64xf32>
    %185 = arith.addf %184, %181 : vector<2x64xf32>
    %186 = vector.extract_strided_slice %183 {offsets = [0, 64], sizes = [2, 64], strides = [1, 1]} : vector<2x128xf32> to vector<2x64xf32>
    %187 = arith.addf %186, %182 : vector<2x64xf32>
    %188 = vector.extract_strided_slice %185 {offsets = [0, 0], sizes = [2, 48], strides = [1, 1]} : vector<2x64xf32> to vector<2x48xf32>
    %189 = arith.negf %188 : vector<2x48xf32>
    %190 = math.exp %189 : vector<2x48xf32>
    %cst_52 = arith.constant 1.000000e+00 : f32
    %191 = vector.broadcast %cst_52 : f32 to vector<2x48xf32>
    %192 = arith.addf %191, %190 : vector<2x48xf32>
    %193 = arith.divf %191, %192 : vector<2x48xf32>
    %194 = vector.extract_strided_slice %187 {offsets = [0, 0], sizes = [2, 48], strides = [1, 1]} : vector<2x64xf32> to vector<2x48xf32>
    %195 = arith.negf %194 : vector<2x48xf32>
    %196 = math.exp %195 : vector<2x48xf32>
    %cst_53 = arith.constant 1.000000e+00 : f32
    %197 = vector.broadcast %cst_53 : f32 to vector<2x48xf32>
    %198 = arith.addf %197, %196 : vector<2x48xf32>
    %199 = arith.divf %197, %198 : vector<2x48xf32>
    %200 = vector.extract_strided_slice %185 {offsets = [0, 48], sizes = [2, 16], strides = [1, 1]} : vector<2x64xf32> to vector<2x16xf32>
    %201 = math.tanh %200 : vector<2x16xf32>
    %202 = vector.extract_strided_slice %187 {offsets = [0, 48], sizes = [2, 16], strides = [1, 1]} : vector<2x64xf32> to vector<2x16xf32>
    %203 = math.tanh %202 : vector<2x16xf32>
    %204 = vector.extract_strided_slice %193 {offsets = [0, 16], sizes = [2, 16], strides = [1, 1]} : vector<2x48xf32> to vector<2x16xf32>
    %205 = arith.mulf %204, %167 : vector<2x16xf32>
    %206 = vector.extract_strided_slice %193 {offsets = [0, 0], sizes = [2, 16], strides = [1, 1]} : vector<2x48xf32> to vector<2x16xf32>
    %207 = arith.mulf %206, %201 : vector<2x16xf32>
    %208 = arith.addf %205, %207 : vector<2x16xf32>
    %209 = vector.extract_strided_slice %199 {offsets = [0, 16], sizes = [2, 16], strides = [1, 1]} : vector<2x48xf32> to vector<2x16xf32>
    %210 = arith.mulf %209, %172 : vector<2x16xf32>
    %211 = vector.extract_strided_slice %199 {offsets = [0, 0], sizes = [2, 16], strides = [1, 1]} : vector<2x48xf32> to vector<2x16xf32>
    %212 = arith.mulf %211, %203 : vector<2x16xf32>
    %213 = arith.addf %210, %212 : vector<2x16xf32>
    %214 = vector.extract_strided_slice %193 {offsets = [0, 32], sizes = [2, 16], strides = [1, 1]} : vector<2x48xf32> to vector<2x16xf32>
    %215 = math.tanh %208 : vector<2x16xf32>
    %216 = arith.mulf %214, %215 : vector<2x16xf32>
    %217 = vector.extract_strided_slice %199 {offsets = [0, 32], sizes = [2, 16], strides = [1, 1]} : vector<2x48xf32> to vector<2x16xf32>
    %218 = math.tanh %213 : vector<2x16xf32>
    %219 = arith.mulf %217, %218 : vector<2x16xf32>
    %220 = tpu.concatenate %216, %219 in 1 : vector<2x16xf32>, vector<2x16xf32> -> vector<2x32xf32>
    %c8_54 = arith.constant 8 : index
    %c0_55 = arith.constant 0 : index
    %221 = vector.load %arg5[%c8_54, %c0_55] : memref<16x32xf32, #tpu.memory_space<vmem>>, vector<2x32xf32>
    tpu.vector_store %arg5[%c8_54, %c0_55], %220 {strides = array<i32>} : memref<16x32xf32, #tpu.memory_space<vmem>>, vector<2x32xf32>,
    %cst_56 = arith.constant dense<0.000000e+00> : vector<2x64xf32>
    %222 = tpu.matmul %216, %4, %cst_56 {dimension_numbers = #tpu.dot_dimension_numbers<[1], [0], [0], [1], [0, 0, 1, 1], [], []>} : vector<2x16xf32>, vector<16x64xf32>, vector<2x64xf32> -> vector<2x64xf32>
    %cst_57 = arith.constant dense<0.000000e+00> : vector<2x64xf32>
    %223 = tpu.matmul %219, %6, %cst_57 {dimension_numbers = #tpu.dot_dimension_numbers<[1], [0], [0], [1], [0, 0, 1, 1], [], []>} : vector<2x16xf32>, vector<16x64xf32>, vector<2x64xf32> -> vector<2x64xf32>
    %c10 = arith.constant 10 : index
    %c0_58 = arith.constant 0 : index
    %224 = vector.load %arg1[%c10, %c0_58] : memref<16x128xf32, #tpu.memory_space<vmem>>, vector<2x128xf32>
    %225 = vector.extract_strided_slice %224 {offsets = [0, 0], sizes = [2, 64], strides = [1, 1]} : vector<2x128xf32> to vector<2x64xf32>
    %226 = arith.addf %225, %222 : vector<2x64xf32>
    %227 = vector.extract_strided_slice %224 {offsets = [0, 64], sizes = [2, 64], strides = [1, 1]} : vector<2x128xf32> to vector<2x64xf32>
    %228 = arith.addf %227, %223 : vector<2x64xf32>
    %229 = vector.extract_strided_slice %226 {offsets = [0, 0], sizes = [2, 48], strides = [1, 1]} : vector<2x64xf32> to vector<2x48xf32>
    %230 = arith.negf %229 : vector<2x48xf32>
    %231 = math.exp %230 : vector<2x48xf32>
    %cst_59 = arith.constant 1.000000e+00 : f32
    %232 = vector.broadcast %cst_59 : f32 to vector<2x48xf32>
    %233 = arith.addf %232, %231 : vector<2x48xf32>
    %234 = arith.divf %232, %233 : vector<2x48xf32>
    %235 = vector.extract_strided_slice %228 {offsets = [0, 0], sizes = [2, 48], strides = [1, 1]} : vector<2x64xf32> to vector<2x48xf32>
    %236 = arith.negf %235 : vector<2x48xf32>
    %237 = math.exp %236 : vector<2x48xf32>
    %cst_60 = arith.constant 1.000000e+00 : f32
    %238 = vector.broadcast %cst_60 : f32 to vector<2x48xf32>
    %239 = arith.addf %238, %237 : vector<2x48xf32>
    %240 = arith.divf %238, %239 : vector<2x48xf32>
    %241 = vector.extract_strided_slice %226 {offsets = [0, 48], sizes = [2, 16], strides = [1, 1]} : vector<2x64xf32> to vector<2x16xf32>
    %242 = math.tanh %241 : vector<2x16xf32>
    %243 = vector.extract_strided_slice %228 {offsets = [0, 48], sizes = [2, 16], strides = [1, 1]} : vector<2x64xf32> to vector<2x16xf32>
    %244 = math.tanh %243 : vector<2x16xf32>
    %245 = vector.extract_strided_slice %234 {offsets = [0, 16], sizes = [2, 16], strides = [1, 1]} : vector<2x48xf32> to vector<2x16xf32>
    %246 = arith.mulf %245, %208 : vector<2x16xf32>
    %247 = vector.extract_strided_slice %234 {offsets = [0, 0], sizes = [2, 16], strides = [1, 1]} : vector<2x48xf32> to vector<2x16xf32>
    %248 = arith.mulf %247, %242 : vector<2x16xf32>
    %249 = arith.addf %246, %248 : vector<2x16xf32>
    %250 = vector.extract_strided_slice %240 {offsets = [0, 16], sizes = [2, 16], strides = [1, 1]} : vector<2x48xf32> to vector<2x16xf32>
    %251 = arith.mulf %250, %213 : vector<2x16xf32>
    %252 = vector.extract_strided_slice %240 {offsets = [0, 0], sizes = [2, 16], strides = [1, 1]} : vector<2x48xf32> to vector<2x16xf32>
    %253 = arith.mulf %252, %244 : vector<2x16xf32>
    %254 = arith.addf %251, %253 : vector<2x16xf32>
    %255 = vector.extract_strided_slice %234 {offsets = [0, 32], sizes = [2, 16], strides = [1, 1]} : vector<2x48xf32> to vector<2x16xf32>
    %256 = math.tanh %249 : vector<2x16xf32>
    %257 = arith.mulf %255, %256 : vector<2x16xf32>
    %258 = vector.extract_strided_slice %240 {offsets = [0, 32], sizes = [2, 16], strides = [1, 1]} : vector<2x48xf32> to vector<2x16xf32>
    %259 = math.tanh %254 : vector<2x16xf32>
    %260 = arith.mulf %258, %259 : vector<2x16xf32>
    %261 = tpu.concatenate %257, %260 in 1 : vector<2x16xf32>, vector<2x16xf32> -> vector<2x32xf32>
    %c10_61 = arith.constant 10 : index
    %c0_62 = arith.constant 0 : index
    %262 = vector.load %arg5[%c10_61, %c0_62] : memref<16x32xf32, #tpu.memory_space<vmem>>, vector<2x32xf32>
    tpu.vector_store %arg5[%c10_61, %c0_62], %261 {strides = array<i32>} : memref<16x32xf32, #tpu.memory_space<vmem>>, vector<2x32xf32>,
    %cst_63 = arith.constant dense<0.000000e+00> : vector<2x64xf32>
    %263 = tpu.matmul %257, %4, %cst_63 {dimension_numbers = #tpu.dot_dimension_numbers<[1], [0], [0], [1], [0, 0, 1, 1], [], []>} : vector<2x16xf32>, vector<16x64xf32>, vector<2x64xf32> -> vector<2x64xf32>
    %cst_64 = arith.constant dense<0.000000e+00> : vector<2x64xf32>
    %264 = tpu.matmul %260, %6, %cst_64 {dimension_numbers = #tpu.dot_dimension_numbers<[1], [0], [0], [1], [0, 0, 1, 1], [], []>} : vector<2x16xf32>, vector<16x64xf32>, vector<2x64xf32> -> vector<2x64xf32>
    %c12 = arith.constant 12 : index
    %c0_65 = arith.constant 0 : index
    %265 = vector.load %arg1[%c12, %c0_65] : memref<16x128xf32, #tpu.memory_space<vmem>>, vector<2x128xf32>
    %266 = vector.extract_strided_slice %265 {offsets = [0, 0], sizes = [2, 64], strides = [1, 1]} : vector<2x128xf32> to vector<2x64xf32>
    %267 = arith.addf %266, %263 : vector<2x64xf32>
    %268 = vector.extract_strided_slice %265 {offsets = [0, 64], sizes = [2, 64], strides = [1, 1]} : vector<2x128xf32> to vector<2x64xf32>
    %269 = arith.addf %268, %264 : vector<2x64xf32>
    %270 = vector.extract_strided_slice %267 {offsets = [0, 0], sizes = [2, 48], strides = [1, 1]} : vector<2x64xf32> to vector<2x48xf32>
    %271 = arith.negf %270 : vector<2x48xf32>
    %272 = math.exp %271 : vector<2x48xf32>
    %cst_66 = arith.constant 1.000000e+00 : f32
    %273 = vector.broadcast %cst_66 : f32 to vector<2x48xf32>
    %274 = arith.addf %273, %272 : vector<2x48xf32>
    %275 = arith.divf %273, %274 : vector<2x48xf32>
    %276 = vector.extract_strided_slice %269 {offsets = [0, 0], sizes = [2, 48], strides = [1, 1]} : vector<2x64xf32> to vector<2x48xf32>
    %277 = arith.negf %276 : vector<2x48xf32>
    %278 = math.exp %277 : vector<2x48xf32>
    %cst_67 = arith.constant 1.000000e+00 : f32
    %279 = vector.broadcast %cst_67 : f32 to vector<2x48xf32>
    %280 = arith.addf %279, %278 : vector<2x48xf32>
    %281 = arith.divf %279, %280 : vector<2x48xf32>
    %282 = vector.extract_strided_slice %267 {offsets = [0, 48], sizes = [2, 16], strides = [1, 1]} : vector<2x64xf32> to vector<2x16xf32>
    %283 = math.tanh %282 : vector<2x16xf32>
    %284 = vector.extract_strided_slice %269 {offsets = [0, 48], sizes = [2, 16], strides = [1, 1]} : vector<2x64xf32> to vector<2x16xf32>
    %285 = math.tanh %284 : vector<2x16xf32>
    %286 = vector.extract_strided_slice %275 {offsets = [0, 16], sizes = [2, 16], strides = [1, 1]} : vector<2x48xf32> to vector<2x16xf32>
    %287 = arith.mulf %286, %249 : vector<2x16xf32>
    %288 = vector.extract_strided_slice %275 {offsets = [0, 0], sizes = [2, 16], strides = [1, 1]} : vector<2x48xf32> to vector<2x16xf32>
    %289 = arith.mulf %288, %283 : vector<2x16xf32>
    %290 = arith.addf %287, %289 : vector<2x16xf32>
    %291 = vector.extract_strided_slice %281 {offsets = [0, 16], sizes = [2, 16], strides = [1, 1]} : vector<2x48xf32> to vector<2x16xf32>
    %292 = arith.mulf %291, %254 : vector<2x16xf32>
    %293 = vector.extract_strided_slice %281 {offsets = [0, 0], sizes = [2, 16], strides = [1, 1]} : vector<2x48xf32> to vector<2x16xf32>
    %294 = arith.mulf %293, %285 : vector<2x16xf32>
    %295 = arith.addf %292, %294 : vector<2x16xf32>
    %296 = vector.extract_strided_slice %275 {offsets = [0, 32], sizes = [2, 16], strides = [1, 1]} : vector<2x48xf32> to vector<2x16xf32>
    %297 = math.tanh %290 : vector<2x16xf32>
    %298 = arith.mulf %296, %297 : vector<2x16xf32>
    %299 = vector.extract_strided_slice %281 {offsets = [0, 32], sizes = [2, 16], strides = [1, 1]} : vector<2x48xf32> to vector<2x16xf32>
    %300 = math.tanh %295 : vector<2x16xf32>
    %301 = arith.mulf %299, %300 : vector<2x16xf32>
    %302 = tpu.concatenate %298, %301 in 1 : vector<2x16xf32>, vector<2x16xf32> -> vector<2x32xf32>
    %c12_68 = arith.constant 12 : index
    %c0_69 = arith.constant 0 : index
    %303 = vector.load %arg5[%c12_68, %c0_69] : memref<16x32xf32, #tpu.memory_space<vmem>>, vector<2x32xf32>
    tpu.vector_store %arg5[%c12_68, %c0_69], %302 {strides = array<i32>} : memref<16x32xf32, #tpu.memory_space<vmem>>, vector<2x32xf32>,
    %cst_70 = arith.constant dense<0.000000e+00> : vector<2x64xf32>
    %304 = tpu.matmul %298, %4, %cst_70 {dimension_numbers = #tpu.dot_dimension_numbers<[1], [0], [0], [1], [0, 0, 1, 1], [], []>} : vector<2x16xf32>, vector<16x64xf32>, vector<2x64xf32> -> vector<2x64xf32>
    %cst_71 = arith.constant dense<0.000000e+00> : vector<2x64xf32>
    %305 = tpu.matmul %301, %6, %cst_71 {dimension_numbers = #tpu.dot_dimension_numbers<[1], [0], [0], [1], [0, 0, 1, 1], [], []>} : vector<2x16xf32>, vector<16x64xf32>, vector<2x64xf32> -> vector<2x64xf32>
    %c14 = arith.constant 14 : index
    %c0_72 = arith.constant 0 : index
    %306 = vector.load %arg1[%c14, %c0_72] : memref<16x128xf32, #tpu.memory_space<vmem>>, vector<2x128xf32>
    %307 = vector.extract_strided_slice %306 {offsets = [0, 0], sizes = [2, 64], strides = [1, 1]} : vector<2x128xf32> to vector<2x64xf32>
    %308 = arith.addf %307, %304 : vector<2x64xf32>
    %309 = vector.extract_strided_slice %306 {offsets = [0, 64], sizes = [2, 64], strides = [1, 1]} : vector<2x128xf32> to vector<2x64xf32>
    %310 = arith.addf %309, %305 : vector<2x64xf32>
    %311 = vector.extract_strided_slice %308 {offsets = [0, 0], sizes = [2, 48], strides = [1, 1]} : vector<2x64xf32> to vector<2x48xf32>
    %312 = arith.negf %311 : vector<2x48xf32>
    %313 = math.exp %312 : vector<2x48xf32>
    %cst_73 = arith.constant 1.000000e+00 : f32
    %314 = vector.broadcast %cst_73 : f32 to vector<2x48xf32>
    %315 = arith.addf %314, %313 : vector<2x48xf32>
    %316 = arith.divf %314, %315 : vector<2x48xf32>
    %317 = vector.extract_strided_slice %310 {offsets = [0, 0], sizes = [2, 48], strides = [1, 1]} : vector<2x64xf32> to vector<2x48xf32>
    %318 = arith.negf %317 : vector<2x48xf32>
    %319 = math.exp %318 : vector<2x48xf32>
    %cst_74 = arith.constant 1.000000e+00 : f32
    %320 = vector.broadcast %cst_74 : f32 to vector<2x48xf32>
    %321 = arith.addf %320, %319 : vector<2x48xf32>
    %322 = arith.divf %320, %321 : vector<2x48xf32>
    %323 = vector.extract_strided_slice %308 {offsets = [0, 48], sizes = [2, 16], strides = [1, 1]} : vector<2x64xf32> to vector<2x16xf32>
    %324 = math.tanh %323 : vector<2x16xf32>
    %325 = vector.extract_strided_slice %310 {offsets = [0, 48], sizes = [2, 16], strides = [1, 1]} : vector<2x64xf32> to vector<2x16xf32>
    %326 = math.tanh %325 : vector<2x16xf32>
    %327 = vector.extract_strided_slice %316 {offsets = [0, 16], sizes = [2, 16], strides = [1, 1]} : vector<2x48xf32> to vector<2x16xf32>
    %328 = arith.mulf %327, %290 : vector<2x16xf32>
    %329 = vector.extract_strided_slice %316 {offsets = [0, 0], sizes = [2, 16], strides = [1, 1]} : vector<2x48xf32> to vector<2x16xf32>
    %330 = arith.mulf %329, %324 : vector<2x16xf32>
    %331 = arith.addf %328, %330 : vector<2x16xf32>
    %332 = vector.extract_strided_slice %322 {offsets = [0, 16], sizes = [2, 16], strides = [1, 1]} : vector<2x48xf32> to vector<2x16xf32>
    %333 = arith.mulf %332, %295 : vector<2x16xf32>
    %334 = vector.extract_strided_slice %322 {offsets = [0, 0], sizes = [2, 16], strides = [1, 1]} : vector<2x48xf32> to vector<2x16xf32>
    %335 = arith.mulf %334, %326 : vector<2x16xf32>
    %336 = arith.addf %333, %335 : vector<2x16xf32>
    %337 = vector.extract_strided_slice %316 {offsets = [0, 32], sizes = [2, 16], strides = [1, 1]} : vector<2x48xf32> to vector<2x16xf32>
    %338 = math.tanh %331 : vector<2x16xf32>
    %339 = arith.mulf %337, %338 : vector<2x16xf32>
    %340 = vector.extract_strided_slice %322 {offsets = [0, 32], sizes = [2, 16], strides = [1, 1]} : vector<2x48xf32> to vector<2x16xf32>
    %341 = math.tanh %336 : vector<2x16xf32>
    %342 = arith.mulf %340, %341 : vector<2x16xf32>
    %343 = tpu.concatenate %339, %342 in 1 : vector<2x16xf32>, vector<2x16xf32> -> vector<2x32xf32>
    %c14_75 = arith.constant 14 : index
    %c0_76 = arith.constant 0 : index
    %344 = vector.load %arg5[%c14_75, %c0_76] : memref<16x32xf32, #tpu.memory_space<vmem>>, vector<2x32xf32>
    tpu.vector_store %arg5[%c14_75, %c0_76], %343 {strides = array<i32>} : memref<16x32xf32, #tpu.memory_space<vmem>>, vector<2x32xf32>,
    %c0_77 = arith.constant 0 : index
    %c0_78 = arith.constant 0 : index
    %c0_79 = arith.constant 0 : index
    %345 = vector.load %arg6[%c0_77, %c0_78, %c0_79] : memref<2x2x16xf32, #tpu.memory_space<vmem>>, vector<1x2x16xf32>
    %346 = vector.shape_cast %345 : vector<1x2x16xf32> to vector<2x16xf32>
    %347 = vector.shape_cast %339 : vector<2x16xf32> to vector<1x2x16xf32>
    tpu.vector_store %arg6[%c0_77, %c0_78, %c0_79], %347 {strides = array<i32>} : memref<2x2x16xf32, #tpu.memory_space<vmem>>, vector<1x2x16xf32>,
    %c1_80 = arith.constant 1 : index
    %c0_81 = arith.constant 0 : index
    %c0_82 = arith.constant 0 : index
    %348 = vector.load %arg6[%c1_80, %c0_81, %c0_82] : memref<2x2x16xf32, #tpu.memory_space<vmem>>, vector<1x2x16xf32>
    %349 = vector.shape_cast %348 : vector<1x2x16xf32> to vector<2x16xf32>
    %350 = vector.shape_cast %342 : vector<2x16xf32> to vector<1x2x16xf32>
    tpu.vector_store %arg6[%c1_80, %c0_81, %c0_82], %350 {strides = array<i32>} : memref<2x2x16xf32, #tpu.memory_space<vmem>>, vector<1x2x16xf32>,
    %c0_83 = arith.constant 0 : index
    %c0_84 = arith.constant 0 : index
    %c0_85 = arith.constant 0 : index
    %351 = vector.load %arg7[%c0_83, %c0_84, %c0_85] : memref<2x2x16xf32, #tpu.memory_space<vmem>>, vector<1x2x16xf32>
    %352 = vector.shape_cast %351 : vector<1x2x16xf32> to vector<2x16xf32>
    %353 = vector.shape_cast %331 : vector<2x16xf32> to vector<1x2x16xf32>
    tpu.vector_store %arg7[%c0_83, %c0_84, %c0_85], %353 {strides = array<i32>} : memref<2x2x16xf32, #tpu.memory_space<vmem>>, vector<1x2x16xf32>,
    %c1_86 = arith.constant 1 : index
    %c0_87 = arith.constant 0 : index
    %c0_88 = arith.constant 0 : index
    %354 = vector.load %arg7[%c1_86, %c0_87, %c0_88] : memref<2x2x16xf32, #tpu.memory_space<vmem>>, vector<1x2x16xf32>
    %355 = vector.shape_cast %354 : vector<1x2x16xf32> to vector<2x16xf32>
    %356 = vector.shape_cast %336 : vector<2x16xf32> to vector<1x2x16xf32>
    tpu.vector_store %arg7[%c1_86, %c0_87, %c0_88], %356 {strides = array<i32>} : memref<2x2x16xf32, #tpu.memory_space<vmem>>, vector<1x2x16xf32>,
    %c0_89 = arith.constant 0 : index
    %c0_90 = arith.constant 0 : index
    %357 = vector.load %arg5[%c0_89, %c0_90] : memref<16x32xf32, #tpu.memory_space<vmem>>, vector<16x32xf32>
    %cst_91 = arith.constant dense<0.000000e+00> : vector<16xf32>
    %358 = vector.multi_reduction <add>, %357, %cst_91 [1] : vector<16x32xf32> to vector<16xf32>
    %359 = vector.shape_cast %358 : vector<16xf32> to vector<16x1xf32>
    %cst_92 = arith.constant 3.200000e+01 : f32
    %360 = vector.broadcast %cst_92 : f32 to vector<16x1xf32>
    %361 = arith.divf %359, %360 : vector<16x1xf32>
    %362 = vector.broadcast %361 : vector<16x1xf32> to vector<16x32xf32>
    %363 = arith.subf %357, %362 : vector<16x32xf32>
    %364 = arith.mulf %363, %363 : vector<16x32xf32>
    %cst_93 = arith.constant dense<0.000000e+00> : vector<16xf32>
    %365 = vector.multi_reduction <add>, %364, %cst_93 [1] : vector<16x32xf32> to vector<16xf32>
    %366 = vector.shape_cast %365 : vector<16xf32> to vector<16x1xf32>
    %cst_94 = arith.constant 3.200000e+01 : f32
    %367 = vector.broadcast %cst_94 : f32 to vector<16x1xf32>
    %368 = arith.divf %366, %367 : vector<16x1xf32>
    %cst_95 = arith.constant 9.99999974E-6 : f32
    %369 = vector.broadcast %cst_95 : f32 to vector<16x1xf32>
    %370 = arith.addf %368, %369 : vector<16x1xf32>
    %371 = math.rsqrt %370 : vector<16x1xf32>
    %372 = vector.broadcast %371 : vector<16x1xf32> to vector<16x32xf32>
    %373 = arith.mulf %363, %372 : vector<16x32xf32>
    %374 = vector.broadcast %7 : vector<1x32xf32> to vector<16x32xf32>
    %375 = arith.mulf %373, %374 : vector<16x32xf32>
    %376 = vector.broadcast %8 : vector<1x32xf32> to vector<16x32xf32>
    %377 = arith.addf %375, %376 : vector<16x32xf32>
    %c0_96 = arith.constant 0 : index
    %c0_97 = arith.constant 0 : index
    %378 = vector.load %arg5[%c0_96, %c0_97] : memref<16x32xf32, #tpu.memory_space<vmem>>, vector<16x32xf32>
    tpu.vector_store %arg5[%c0_96, %c0_97], %377 {strides = array<i32>} : memref<16x32xf32, #tpu.memory_space<vmem>>, vector<16x32xf32>,
    return
  }
  func.func @transform_0(%arg0: i32) -> (i32, i32) {
    %c0_i32 = arith.constant 0 : i32
    %c0_i32_0 = arith.constant 0 : i32
    return %arg0, %c0_i32 : i32, i32
  }
  func.func @transform_2(%arg0: i32) -> (i32, i32) {
    %c0_i32 = arith.constant 0 : i32
    %c0_i32_0 = arith.constant 0 : i32
    %c0_i32_1 = arith.constant 0 : i32
    return %c0_i32, %c0_i32_0 : i32, i32
  }
  func.func @transform_3(%arg0: i32) -> (i32, i32) {
    %c0_i32 = arith.constant 0 : i32
    %c0_i32_0 = arith.constant 0 : i32
    %c0_i32_1 = arith.constant 0 : i32
    return %c0_i32, %c0_i32_0 : i32, i32
  }
  func.func @transform_4(%arg0: i32) -> (i32, i32) {
    %c0_i32 = arith.constant 0 : i32
    %c0_i32_0 = arith.constant 0 : i32
    return %arg0, %c0_i32 : i32, i32
  }
  func.func @transform_5(%arg0: i32) -> (i32, i32, i32) {
    %c0_i32 = arith.constant 0 : i32
    %c0_i32_0 = arith.constant 0 : i32
    %c0_i32_1 = arith.constant 0 : i32
    %c0_i32_2 = arith.constant 0 : i32
    return %c0_i32, %c0_i32_0, %c0_i32_1 : i32, i32, i32
  }
  func.func @transform_6(%arg0: i32) -> (i32, i32, i32) {
    %c0_i32 = arith.constant 0 : i32
    %c0_i32_0 = arith.constant 0 : i32
    %c0_i32_1 = arith.constant 0 : i32
    %c0_i32_2 = arith.constant 0 : i32
    return %c0_i32, %c0_i32_0, %c0_i32_1 : i32, i32, i32
  }
}

</mosaic_0001>

<llo_original>
// kernel: xlstm_block.1
$region0: #{xlstm_block.1}
  #allocation0 [shape = 'u32[]', space=smem, size = 0x4, offset = 0x4, fixed_abs, tag = 'smem constant byte address 0x4 - core index']
  #allocation1 [shape = 'u32[144,128]{1,0:T(1,128)}', space=vmem, size = 0x12000, scoped, tag = 'internal scratch']
  #allocation2 [shape = 'f32[2,16,64]{2,1,0:T(8,128)}', space=vmem, size = 0x4000, scoped, tag = 'scratch operand']
  #allocation3 [shape = 's32[1]{0}', space=sflag, size = 0x4, scoped, tag = 'scratch operand']
  #allocation8 [shape = 's32[]', space=sflag, size = 0x4, offset = 0, fixed_abs, tag = 'sflag constant byte address 0x0 - dummy sync flag']
  %s0 = inlined_call_operand.vmem [shape: f32[32,128], index: 0, kind: input, shape index: {}]
  %s1 = inlined_call_operand.vmem [shape: f32[2,16,64], index: 1, kind: input, shape index: {}]
  %s2 = inlined_call_operand.vmem [shape: f32[1,32], index: 2, kind: input, shape index: {}]
  %s3 = inlined_call_operand.vmem [shape: f32[1,32], index: 3, kind: input, shape index: {}]
  %s4 = inlined_call_operand.vmem [shape: f32[32,32], index: 4, kind: output, shape index: {0}]
  %s5 = inlined_call_operand.hbm [shape: f32[2,2,16], index: 5, kind: output, shape index: {1}]
  %s6 = inlined_call_operand.hbm [shape: f32[2,2,16], index: 6, kind: output, shape index: {2}]
  %7 = xla_tuple %s4, %s5, %s6
  %s8 = sld [smem:[#allocation0]]
  $region99: #{xlstm_block.1} parent=0
    _
  %s10 = ssub.s32 1, %s8
  %s11 = scalar_select 0, %s10, %s8
  $region1: #{xlstm_block.1} parent=0
    #allocation4 [shape = 'u8[2048]{0}', space=vmem, size = 0x800, scoped, tag = 'output window, operand 1, single buffered']
    #allocation5 [shape = 's32[2]{0}', space=sflag, size = 0x8, scoped, tag = 'scoped memory for xlstm_block.1']
    #allocation6 [shape = 'u8[2048]{0}', space=vmem, size = 0x800, scoped, tag = 'output window, operand 2, single buffered']
    #allocation7 [shape = 's32[1]{0}', space=sflag, size = 0x4, scoped, tag = 'scoped memory for xlstm_block.1']
    %12 = vsyncpa [#allocation5], 0
    %13 = vsyncpa [#allocation7], 0
    loop: start=0, step=1, limit=4
    $region2: #{xlstm_block.1} parent=1 // loop_pre_header
      _
    $region3: #{xlstm_block.1} parent=1 // loop_header
      %s15 = sphi 0, %s19
      %p16 = scmp.ge.s32.totalorder %s15, 4
      %s25 = sphi 0, %s27
      %s28 = sphi 0, %s25
      %s29 = sphi 0, %s28
      %s45 = sphi 0, %s29
      %s49 = sphi 0, %s49
      %s51 = sphi 0, %s49
      %s52 = sphi 0, %s51
      %s66 = sphi 0, %s52
      %s70 = sphi 0, %s70
      %s72 = sphi 0, %s70
      %s73 = sphi 0, %s72
      %s87 = sphi 0, %s73
      %s93 = sphi 0, %s95
      %s96 = sphi 0, %s93
      %s97 = sphi 0, %s96
      %s113 = sphi 0, %s97
      %s117 = sphi 0, %s117
      %s119 = sphi 0, %s117
      %s120 = sphi 0, %s119
      %s134 = sphi 0, %s120
      %s138 = sphi 0, %s138
      %s140 = sphi 0, %s138
      %s141 = sphi 0, %s140
      %s155 = sphi 0, %s141
    $region4: #{xlstm_block.1} parent=1 // loop_header_branch
      %18 = sbr.rel (%p16) target = $region8
    $region5: #{xlstm_block.1} parent=1 // loop_body
      %s20 = ssub.s32 %s15, 1
      %s21 = ssub.s32 %s15, 2
      %s22 = sadd.s32 %s15, 1
      %s23 = ssub.s32 %s15, %s22
      %p24 = scmp.eq.s32.totalorder %s23, 0
      %s26 = sadd.s32 %s25, 1
      %s27 = scalar_select %p24, %s25, %s26
      %p30 = pneg %p24
      %p31 = scmp.eq.s32.totalorder %s15, 1
      %p32 = por %p30, %p31
      %p33 = scmp.ne.s32.totalorder %s25, %s28
      %p34 = scmp.eq.s32.totalorder %s15, 0
      %p35 = por %p33, %p34
      %p36 = scmp.ne.s32.totalorder %s25, %s28
      %p37 = scmp.eq.s32.totalorder %s20, 1
      %p38 = por %p36, %p37
      %p39 = scmp.ne.s32.totalorder %s28, %s29
      %p40 = scmp.eq.s32.totalorder %s20, 0
      %p41 = por %p39, %p40
      %p42 = scmp.ne.s32.totalorder %s28, %s29
      %p43 = scmp.eq.s32.totalorder %s21, 1
      %p44 = por %p42, %p43
      %p46 = scmp.ne.s32.totalorder %s29, %s45
      %p47 = scmp.eq.s32.totalorder %s21, 0
      %p48 = por %p46, %p47
      %s50 = sadd.s32 %s49, 1
      %p53 = scmp.eq.s32.totalorder %s15, 1
      %p54 = scmp.ne.s32.totalorder %s49, %s51
      %p55 = scmp.eq.s32.totalorder %s15, 0
      %p56 = por %p54, %p55
      %p57 = scmp.ne.s32.totalorder %s49, %s51
      %p58 = scmp.eq.s32.totalorder %s20, 1
      %p59 = por %p57, %p58
      %p60 = scmp.ne.s32.totalorder %s51, %s52
      %p61 = scmp.eq.s32.totalorder %s20, 0
      %p62 = por %p60, %p61
      %p63 = scmp.ne.s32.totalorder %s51, %s52
      %p64 = scmp.eq.s32.totalorder %s21, 1
      %p65 = por %p63, %p64
      %p67 = scmp.ne.s32.totalorder %s52, %s66
      %p68 = scmp.eq.s32.totalorder %s21, 0
      %p69 = por %p67, %p68
      %s71 = sadd.s32 %s70, 1
      %p74 = scmp.eq.s32.totalorder %s15, 1
      %p75 = scmp.ne.s32.totalorder %s70, %s72
      %p76 = scmp.eq.s32.totalorder %s15, 0
      %p77 = por %p75, %p76
      %p78 = scmp.ne.s32.totalorder %s70, %s72
      %p79 = scmp.eq.s32.totalorder %s20, 1
      %p80 = por %p78, %p79
      %p81 = scmp.ne.s32.totalorder %s72, %s73
      %p82 = scmp.eq.s32.totalorder %s20, 0
      %p83 = por %p81, %p82
      %p84 = scmp.ne.s32.totalorder %s72, %s73
      %p85 = scmp.eq.s32.totalorder %s21, 1
      %p86 = por %p84, %p85
      %p88 = scmp.ne.s32.totalorder %s73, %s87
      %p89 = scmp.eq.s32.totalorder %s21, 0
      %p90 = por %p88, %p89
      %s91 = ssub.s32 %s15, %s22
      %p92 = scmp.eq.s32.totalorder %s91, 0
      %s94 = sadd.s32 %s93, 1
      %s95 = scalar_select %p92, %s93, %s94
      %p98 = pneg %p92
      %p99 = scmp.eq.s32.totalorder %s15, 1
      %p100 = por %p98, %p99
      %p101 = scmp.ne.s32.totalorder %s93, %s96
      %p102 = scmp.eq.s32.totalorder %s15, 0
      %p103 = por %p101, %p102
      %p104 = scmp.ne.s32.totalorder %s93, %s96
      %p105 = scmp.eq.s32.totalorder %s20, 1
      %p106 = por %p104, %p105
      %p107 = scmp.ne.s32.totalorder %s96, %s97
      %p108 = scmp.eq.s32.totalorder %s20, 0
      %p109 = por %p107, %p108
      %p110 = scmp.ne.s32.totalorder %s96, %s97
      %p111 = scmp.eq.s32.totalorder %s21, 1
      %p112 = por %p110, %p111
      %p114 = scmp.ne.s32.totalorder %s97, %s113
      %p115 = scmp.eq.s32.totalorder %s21, 0
      %p116 = por %p114, %p115
      %s118 = sadd.s32 %s117, 1
      %p121 = scmp.eq.s32.totalorder %s15, 1
      %p122 = scmp.ne.s32.totalorder %s117, %s119
      %p123 = scmp.eq.s32.totalorder %s15, 0
      %p124 = por %p122, %p123
      %p125 = scmp.ne.s32.totalorder %s117, %s119
      %p126 = scmp.eq.s32.totalorder %s20, 1
      %p127 = por %p125, %p126
      %p128 = scmp.ne.s32.totalorder %s119, %s120
      %p129 = scmp.eq.s32.totalorder %s20, 0
      %p130 = por %p128, %p129
      %p131 = scmp.ne.s32.totalorder %s119, %s120
      %p132 = scmp.eq.s32.totalorder %s21, 1
      %p133 = por %p131, %p132
      %p135 = scmp.ne.s32.totalorder %s120, %s134
      %p136 = scmp.eq.s32.totalorder %s21, 0
      %p137 = por %p135, %p136
      %s139 = sadd.s32 %s138, 1
      %p142 = scmp.eq.s32.totalorder %s15, 1
      %p143 = scmp.ne.s32.totalorder %s138, %s140
      %p144 = scmp.eq.s32.totalorder %s15, 0
      %p145 = por %p143, %p144
      %p146 = scmp.ne.s32.totalorder %s138, %s140
      %p147 = scmp.eq.s32.totalorder %s20, 1
      %p148 = por %p146, %p147
      %p149 = scmp.ne.s32.totalorder %s140, %s141
      %p150 = scmp.eq.s32.totalorder %s20, 0
      %p151 = por %p149, %p150
      %p152 = scmp.ne.s32.totalorder %s140, %s141
      %p153 = scmp.eq.s32.totalorder %s21, 1
      %p154 = por %p152, %p153
      %p156 = scmp.ne.s32.totalorder %s141, %s155
      %p157 = scmp.eq.s32.totalorder %s21, 0
      %p158 = por %p156, %p157
      %p159 = scmp.le.s32.totalorder 1, %s15
      %p160 = scmp.lt.s32.totalorder %s15, 3
      %p161 = pnand %p159, %p160
      %p162 = pneg %p161
      // Predicated region
      $region9: #{xlstm_block.1} parent=5 // pred_check
        _
      $region10: #{xlstm_block.1} parent=5 // pred_check_branch
        %164 = sbr.rel (%p161) target = $region12
      $region11: #{xlstm_block.1} parent=5 // pred_region
        %s165 = ssub.s32 %s15, 1
        // Predicated region
        $region13: #{xlstm_block.1} parent=11 // pred_check
          %p166 = pneg %p62
        $region14: #{xlstm_block.1} parent=11 // pred_check_branch
          %168 = sbr.rel (%p166) target = $region16
        $region15: #{xlstm_block.1} parent=11 // pred_region
          _
        $region16: #{xlstm_block.1} parent=11 // pred_fallthru
          _
        // Predicated region
        $region17: #{xlstm_block.1} parent=11 // pred_check
          %p169 = pneg %p83
        $region18: #{xlstm_block.1} parent=11 // pred_check_branch
          %171 = sbr.rel (%p169) target = $region20
        $region19: #{xlstm_block.1} parent=11 // pred_region
          _
        $region20: #{xlstm_block.1} parent=11 // pred_fallthru
          _
      $region12: #{xlstm_block.1} parent=5 // pred_fallthru
        _
      %p172 = scmp.lt.s32.totalorder %s15, 2
      // Predicated region
      $region21: #{xlstm_block.1} parent=5 // pred_check
        %p173 = pneg %p172
      $region22: #{xlstm_block.1} parent=5 // pred_check_branch
        %175 = sbr.rel (%p173) target = $region24
      $region23: #{xlstm_block.1} parent=5 // pred_region
        // Predicated region
        $region25: #{xlstm_block.1} parent=23 // pred_check
          %p176 = pneg %p35
        $region26: #{xlstm_block.1} parent=23 // pred_check_branch
          %178 = sbr.rel (%p176) target = $region28
        $region27: #{xlstm_block.1} parent=23 // pred_region
          %s179 = smul.u32 2, %s15
          %p180 = scmp.lt.s32.totalorder %s179, 3
          %s181 = scalar_select %p180, %s179, 3
          %s182 = smul.addr %s181, 8
          %s183 = scalar_lea.vmem %s0, %s182
          %s184 = smul.u32 2, %s15
        $region28: #{xlstm_block.1} parent=23 // pred_fallthru
          _
      $region24: #{xlstm_block.1} parent=5 // pred_fallthru
        _
      %p185 = scmp.le.s32.totalorder 1, %s15
      %p186 = scmp.lt.s32.totalorder %s15, 3
      %p187 = pnand %p185, %p186
      %p188 = pneg %p187
      // Predicated region
      $region29: #{xlstm_block.1} parent=5 // pred_check
        _
      $region30: #{xlstm_block.1} parent=5 // pred_check_branch
        %190 = sbr.rel (%p187) target = $region32
      $region31: #{xlstm_block.1} parent=5 // pred_region
        %s191 = ssub.s32 %s15, 1
        %s192 = smul.u32 2, %s20
        %p193 = scmp.lt.s32.totalorder %s192, 3
        %s194 = scalar_select %p193, %s192, 3
        %s195 = smul.addr %s194, 8
        %s196 = scalar_lea.vmem %s0, %s195
        %p197 = pneg %p41
        %p198 = pneg %p38
        %p199 = pneg %p62
        %p200 = pneg %p59
        %p201 = pneg %p83
        %p202 = pneg %p80
        %p203 = pneg %p109
        %p204 = pneg %p106
        %s205 = smul.u32 2, %s20
        %p206 = scmp.lt.s32.totalorder %s205, 3
        %s207 = scalar_select %p206, %s205, 3
        %s208 = smul.addr %s207, 8
        %s209 = scalar_lea.vmem %s4, %s208
        %p210 = pneg %p130
        %p211 = pneg %p127
        %p212 = pneg %p151
        %p213 = pneg %p148
        %s214 = smul.u32 2, %s20
        %p215 = scmp.lt.s32.totalorder %s214, 3
        %s216 = scalar_select %p215, %s214, 3
        %s217 = smul.addr %s216, 8
        %s218 = scalar_lea.vmem %s0, %s217
        %s219 = smul.u32 2, %s20
        %s220 = smul.u32 2, %s20
        %p221 = scmp.lt.s32.totalorder %s220, 3
        %s222 = scalar_select %p221, %s220, 3
        %s223 = smul.addr %s222, 8
        %s224 = scalar_lea.vmem %s4, %s223
        %s225 = smul.u32 2, %s20
        %p226 = scmp.eq.s32.totalorder %s20, 0
        // Predicated region
        $region33: #{xlstm_block.1} parent=31 // pred_check
          %p227 = pneg %p226
        $region34: #{xlstm_block.1} parent=31 // pred_check_branch
          %229 = sbr.rel (%p227) target = $region36
        $region35: #{xlstm_block.1} parent=31 // pred_region
          %p231 = scmp.lt.u32.totalorder 32, 8
          %p232 = pneg %p231
          // Predicated region
          $region37: #{xlstm_block.1} parent=35 // pred_check
            _
          $region38: #{xlstm_block.1} parent=35 // pred_check_branch
            %234 = sbr.rel (%p231) target = $region40
          $region39: #{xlstm_block.1} parent=35 // pred_region
            %s250 = sand.u32 32, 7
            %p251 = scmp.eq.s32.totalorder %s250, 0
            // Predicated region
            $region52: #{xlstm_block.1} parent=39 // pred_check
              %p252 = pneg %p251
            $region53: #{xlstm_block.1} parent=39 // pred_check_branch
              %254 = sbr.rel (%p252) target = $region55
            $region54: #{xlstm_block.1} parent=39 // pred_region
              loop: start=0, step=1, limit=1
              $region56: #{xlstm_block.1} parent=54 // loop_pre_header
                _
              $region57: #{xlstm_block.1} parent=54 // loop_header
                %s256 = sphi 0, %s260
                %p257 = scmp.ge.s32.totalorder %s256, 1
                %s261 = sphi %s1, %s1
                %s262 = sphi [#allocation2], [#allocation2]
              $region58: #{xlstm_block.1} parent=54 // loop_header_branch
                %259 = sbr.rel (%p257) target = $region62
              $region59: #{xlstm_block.1} parent=54 // loop_body
                %v263 = vld [vmem:[%s261] sm:$0xff]
                %264 = vst [vmem:[%s262] sm:$0xff] %v263
                %v265 = vld [vmem:[%s261 + $0x8] sm:$0xff]
                %266 = vst [vmem:[%s262 + $0x8] sm:$0xff] %v265
                %v267 = vld [vmem:[%s261 + $0x10] sm:$0xff]
                %268 = vst [vmem:[%s262 + $0x10] sm:$0xff] %v267
                %v269 = vld [vmem:[%s261 + $0x18] sm:$0xff]
                %270 = vst [vmem:[%s262 + $0x18] sm:$0xff] %v269
              $region60: #{xlstm_block.1} parent=54 // loop_footer
                %s260 = sadd.s32 1, %s256
              $region61: #{xlstm_block.1} parent=54 // loop_footer_branch
                %255 = sbr.rel target = $region57
              $region62: #{xlstm_block.1} parent=54 // loop_exit
                _
            $region55: #{xlstm_block.1} parent=39 // pred_fallthru
              _
            %p271 = pneg %p251
            // Predicated region
            $region63: #{xlstm_block.1} parent=39 // pred_check
              _
            $region64: #{xlstm_block.1} parent=39 // pred_check_branch
              %273 = sbr.rel (%p251) target = $region66
            $region65: #{xlstm_block.1} parent=39 // pred_region
              %s274 = sand.u32 32, 7
            $region66: #{xlstm_block.1} parent=39 // pred_fallthru
              _
          $region40: #{xlstm_block.1} parent=35 // pred_fallthru
            _
          // Predicated region
          $region41: #{xlstm_block.1} parent=35 // pred_check
            %p235 = pneg %p231
          $region42: #{xlstm_block.1} parent=35 // pred_check_branch
            %237 = sbr.rel (%p235) target = $region44
          $region43: #{xlstm_block.1} parent=35 // pred_region
            %s238 = sshll.u32 1, 32
            %s239 = ssub.s32 %s238, 1
            loop: start=0, step=1, limit=1
            $region45: #{xlstm_block.1} parent=43 // loop_pre_header
              _
            $region46: #{xlstm_block.1} parent=43 // loop_header
              %s241 = sphi 0, %s245
              %p242 = scmp.ge.s32.totalorder %s241, 1
              %s246 = sphi %s1, %s1
              %s247 = sphi [#allocation2], [#allocation2]
            $region47: #{xlstm_block.1} parent=43 // loop_header_branch
              %244 = sbr.rel (%p242) target = $region51
            $region48: #{xlstm_block.1} parent=43 // loop_body
              %v248 = vld [vmem:[%s246] sm:%s239]
              %249 = vst [vmem:[%s247] sm:%s239] %v248
            $region49: #{xlstm_block.1} parent=43 // loop_footer
              %s245 = sadd.s32 1, %s241
            $region50: #{xlstm_block.1} parent=43 // loop_footer_branch
              %240 = sbr.rel target = $region46
            $region51: #{xlstm_block.1} parent=43 // loop_exit
              _
          $region44: #{xlstm_block.1} parent=35 // pred_fallthru
            _
          // Predicated region
          $region67: #{xlstm_block.1} parent=35 // pred_check
            _
          $region68: #{xlstm_block.1} parent=35 // pred_check_branch
            %277 = sbr.rel (0) target = $region70
          $region69: #{xlstm_block.1} parent=35 // pred_region
            %278 = vsyncadd [#allocation3], 512
          $region70: #{xlstm_block.1} parent=35 // pred_fallthru
            _
          %s279 = smul.u32 2, 16
          %s280 = smul.u32 %s279, 1
          %s281 = sshll.u32 %s280, 4
          %282 = dma.done [#allocation3], %s281
          %vm283 = vcmask 123904
          %284 = vst.msk [vmem:[#allocation4] sm:$0x3] %vm283, 0.0
          %285 = vst.msk [vmem:[#allocation4 + $0x2] sm:$0x3] %vm283, 0.0
          %286 = vst.msk [vmem:[#allocation6] sm:$0x3] %vm283, 0.0
          %287 = vst.msk [vmem:[#allocation6 + $0x2] sm:$0x3] %vm283, 0.0
        $region36: #{xlstm_block.1} parent=31 // pred_fallthru
          _
        %v288 = vld [vmem:[#allocation2] sm:$0xff]
        %v289 = vld [vmem:[#allocation2 + $0x8] sm:$0xff]
        %s290 = scalar_lea.vmem [#allocation2], 16
        %v291 = vld [vmem:[%s290] sm:$0xff]
        %v292 = vld [vmem:[%s290 + $0x8] sm:$0xff]
        %v293 = vld [vmem:[%s2] sm:$0x1]
        %v294 = vld [vmem:[%s3] sm:$0x1]
        %v295 = vld [vmem:[#allocation4] sm:$0x3]
        %s296 = scalar_lea.vmem [#allocation4], 2
        %v297 = vld [vmem:[%s296] sm:$0x3]
        %v298 = vld [vmem:[#allocation6] sm:$0x3]
        %s299 = scalar_lea.vmem [#allocation6], 2
        %v300 = vld [vmem:[%s299] sm:$0x3]
        %vm301 = vcmask 130048
        %v303 = vsel %vm301, %v295, 0
        %305 = vmatprep.subr.mxu0 0.0
        %306 = vmatpush1.msra.mxu0 0.0
        %307 = vmatprep.subr.mxu0 0.0
        %308 = vmatpush1.msra.mxu0 0.0
        %309 = vmatprep.subr.mxu0 0.0
        %310 = vmatpush1.msra.mxu0 0.0
        %311 = vmatprep.subr.mxu0 0.0
        %312 = vmatpush1.msra.mxu0 0.0
        %313 = vmatprep.subr.mxu0 0.0
        %314 = vmatpush1.msra.mxu0 0.0
        %315 = vmatprep.subr.mxu0 0.0
        %316 = vmatpush1.msra.mxu0 0.0
        %317 = vmatprep.subr.mxu0 0.0
        %318 = vmatpush1.msra.mxu0 0.0
        %319 = vmatprep.subr.mxu0 0.0
        %320 = vmatpush1.msra.mxu0 0.0
        %321 = vmatprep.subr.mxu0 0.0
        %322 = vmatpush1.msra.mxu0 0.0
        %323 = vmatprep.subr.mxu0 0.0
        %324 = vmatpush1.msra.mxu0 0.0
        %325 = vmatprep.subr.mxu0 0.0
        %326 = vmatpush1.msra.mxu0 0.0
        %327 = vmatprep.subr.mxu0 0.0
        %328 = vmatpush1.msra.mxu0 0.0
        %329 = vmatprep.subr.mxu0 0.0
        %330 = vmatpush1.msra.mxu0 0.0
        %331 = vmatprep.subr.mxu0 0.0
        %332 = vmatpush1.msra.mxu0 0.0
        %333 = vmatprep.subr.mxu0 0.0
        %334 = vmatpush1.msra.mxu0 %v289
        %335 = vmatprep.subr.mxu0 0.0
        %336 = vmatpush1.msra.mxu0 %v288
        %337 = vmatprep.subr.mxu0 0.0
        %338 = vmatpush2.msra.mxu0 0.0
        %339 = vmatprep.subr.mxu0 0.0
        %340 = vmatpush2.msra.mxu0 0.0
        %341 = vmatprep.subr.mxu0 0.0
        %342 = vmatpush2.msra.mxu0 0.0
        %343 = vmatprep.subr.mxu0 0.0
        %344 = vmatpush2.msra.mxu0 0.0
        %345 = vmatprep.subr.mxu0 0.0
        %346 = vmatpush2.msra.mxu0 0.0
        %347 = vmatprep.subr.mxu0 0.0
        %348 = vmatpush2.msra.mxu0 0.0
        %349 = vmatprep.subr.mxu0 0.0
        %350 = vmatpush2.msra.mxu0 0.0
        %351 = vmatprep.subr.mxu0 0.0
        %352 = vmatpush2.msra.mxu0 0.0
        %353 = vmatprep.subr.mxu0 0.0
        %354 = vmatpush2.msra.mxu0 0.0
        %355 = vmatprep.subr.mxu0 0.0
        %356 = vmatpush2.msra.mxu0 0.0
        %357 = vmatprep.subr.mxu0 0.0
        %358 = vmatpush2.msra.mxu0 0.0
        %359 = vmatprep.subr.mxu0 0.0
        %360 = vmatpush2.msra.mxu0 0.0
        %361 = vmatprep.subr.mxu0 0.0
        %362 = vmatpush2.msra.mxu0 0.0
        %363 = vmatprep.subr.mxu0 0.0
        %364 = vmatpush2.msra.mxu0 0.0
        %365 = vmatprep.subr.mxu0 0.0
        %366 = vmatpush2.msra.mxu0 0.0
        %367 = vmatprep.subr.mxu0 0.0
        %368 = vmatpush2.msra.mxu0 0.0
        %369 = vmatprep.mubr.f32.mxu0 0.0
        %370 = vmatmul.mubr.f32.gmra.mxu0 %v303
        %v371 = vpop.f32.mrf.mxu0
        %v372 = vadd.f32 0.0, %v371
        %v373 = vpop.f32.mrf.mxu0
        %374 = vdwg.mxu0
        %v376 = vsel %vm301, %v297, 0
        %378 = vmatprep.subr.mxu0 0.0
        %379 = vmatpush1.msra.mxu0 0.0
        %380 = vmatprep.subr.mxu0 0.0
        %381 = vmatpush1.msra.mxu0 0.0
        %382 = vmatprep.subr.mxu0 0.0
        %383 = vmatpush1.msra.mxu0 0.0
        %384 = vmatprep.subr.mxu0 0.0
        %385 = vmatpush1.msra.mxu0 0.0
        %386 = vmatprep.subr.mxu0 0.0
        %387 = vmatpush1.msra.mxu0 0.0
        %388 = vmatprep.subr.mxu0 0.0
        %389 = vmatpush1.msra.mxu0 0.0
        %390 = vmatprep.subr.mxu0 0.0
        %391 = vmatpush1.msra.mxu0 0.0
        %392 = vmatprep.subr.mxu0 0.0
        %393 = vmatpush1.msra.mxu0 0.0
        %394 = vmatprep.subr.mxu0 0.0
        %395 = vmatpush1.msra.mxu0 0.0
        %396 = vmatprep.subr.mxu0 0.0
        %397 = vmatpush1.msra.mxu0 0.0
        %398 = vmatprep.subr.mxu0 0.0
        %399 = vmatpush1.msra.mxu0 0.0
        %400 = vmatprep.subr.mxu0 0.0
        %401 = vmatpush1.msra.mxu0 0.0
        %402 = vmatprep.subr.mxu0 0.0
        %403 = vmatpush1.msra.mxu0 0.0
        %404 = vmatprep.subr.mxu0 0.0
        %405 = vmatpush1.msra.mxu0 0.0
        %406 = vmatprep.subr.mxu0 0.0
        %407 = vmatpush1.msra.mxu0 %v292
        %408 = vmatprep.subr.mxu0 0.0
        %409 = vmatpush1.msra.mxu0 %v291
        %410 = vmatprep.subr.mxu0 0.0
        %411 = vmatpush2.msra.mxu0 0.0
        %412 = vmatprep.subr.mxu0 0.0
        %413 = vmatpush2.msra.mxu0 0.0
        %414 = vmatprep.subr.mxu0 0.0
        %415 = vmatpush2.msra.mxu0 0.0
        %416 = vmatprep.subr.mxu0 0.0
        %417 = vmatpush2.msra.mxu0 0.0
        %418 = vmatprep.subr.mxu0 0.0
        %419 = vmatpush2.msra.mxu0 0.0
        %420 = vmatprep.subr.mxu0 0.0
        %421 = vmatpush2.msra.mxu0 0.0
        %422 = vmatprep.subr.mxu0 0.0
        %423 = vmatpush2.msra.mxu0 0.0
        %424 = vmatprep.subr.mxu0 0.0
        %425 = vmatpush2.msra.mxu0 0.0
        %426 = vmatprep.subr.mxu0 0.0
        %427 = vmatpush2.msra.mxu0 0.0
        %428 = vmatprep.subr.mxu0 0.0
        %429 = vmatpush2.msra.mxu0 0.0
        %430 = vmatprep.subr.mxu0 0.0
        %431 = vmatpush2.msra.mxu0 0.0
        %432 = vmatprep.subr.mxu0 0.0
        %433 = vmatpush2.msra.mxu0 0.0
        %434 = vmatprep.subr.mxu0 0.0
        %435 = vmatpush2.msra.mxu0 0.0
        %436 = vmatprep.subr.mxu0 0.0
        %437 = vmatpush2.msra.mxu0 0.0
        %438 = vmatprep.subr.mxu0 0.0
        %439 = vmatpush2.msra.mxu0 0.0
        %440 = vmatprep.subr.mxu0 0.0
        %441 = vmatpush2.msra.mxu0 0.0
        %442 = vmatprep.mubr.f32.mxu0 0.0
        %443 = vmatmul.mubr.f32.gmra.mxu0 %v376
        %v444 = vpop.f32.mrf.mxu0
        %v445 = vadd.f32 0.0, %v444
        %v446 = vpop.f32.mrf.mxu0
        %447 = vdwg.mxu0
        %v448 = vld [vmem:[%s218] sm:$0x3]
        %v449 = vadd.f32 %v448, %v372
        %451 = vrot.lane.b32.xlu0 %v445, 64
        %v452 = vpop.permute.xlu0 %451
        %v454 = vadd.f32 %v448, %v452
        %v455 = vxor.u32 %v449, 2147483648
        %v456 = vmul.f32 %v455, 1.442695
        %v457 = vpow.pop %v456
        %v458 = vadd.f32 %v457, 1.0
        %v459 = vrcp.pop %v458
        %v460 = vmul.f32 1.0, %v459
        %v461 = vxor.u32 %v454, 2147483648
        %v462 = vmul.f32 %v461, 1.442695
        %v463 = vpow.pop %v462
        %v464 = vadd.f32 %v463, 1.0
        %v465 = vrcp.pop %v464
        %v466 = vmul.f32 1.0, %v465
        %v467 = vtanh.pop %v449
        %v468 = vtanh.pop %v454
        %470 = vrot.lane.b32.xlu0 %v298, 16
        %v471 = vpop.permute.xlu0 %470
        %v473 = vmul.f32 %v460, %v471
        %475 = vrot.lane.b32.xlu0 %v467, 80
        %v476 = vpop.permute.xlu0 %475
        %v478 = vmul.f32 %v460, %v476
        %480 = vrot.lane.b32.xlu0 %v478, 16
        %v481 = vpop.permute.xlu0 %480
        %v483 = vadd.f32 %v473, %v481
        %485 = vrot.lane.b32.xlu0 %v300, 80
        %v486 = vpop.permute.xlu0 %485
        %v488 = vmul.f32 %v466, %v486
        %490 = vrot.lane.b32.xlu0 %v468, 80
        %v491 = vpop.permute.xlu0 %490
        %v493 = vmul.f32 %v466, %v491
        %495 = vrot.lane.b32.xlu0 %v493, 16
        %v496 = vpop.permute.xlu0 %495
        %v498 = vadd.f32 %v488, %v496
        %v499 = vtanh.pop %v483
        %501 = vrot.lane.b32.xlu0 %v499, 16
        %v502 = vpop.permute.xlu0 %501
        %v504 = vmul.f32 %v460, %v502
        %v505 = vtanh.pop %v498
        %507 = vrot.lane.b32.xlu0 %v505, 16
        %v508 = vpop.permute.xlu0 %507
        %v510 = vmul.f32 %v466, %v508
        %512 = vrot.lane.b32.xlu0 %v504, 96
        %v513 = vpop.permute.xlu0 %512
        %516 = vrot.lane.b32.xlu0 %v510, 48
        %v517 = vpop.permute.xlu0 %516
        %v519 = vsel %vm301, %v513, %v517
        %vm520 = vcmask 254976
        %521 = vst.msk [vmem:[%s224] sm:$0x3] %vm520, %v519
        %v522 = vsel %vm301, %v513, 0
        %524 = vmatprep.subr.mxu0 0.0
        %525 = vmatpush1.msra.mxu0 0.0
        %526 = vmatprep.subr.mxu0 0.0
        %527 = vmatpush1.msra.mxu0 0.0
        %528 = vmatprep.subr.mxu0 0.0
        %529 = vmatpush1.msra.mxu0 0.0
        %530 = vmatprep.subr.mxu0 0.0
        %531 = vmatpush1.msra.mxu0 0.0
        %532 = vmatprep.subr.mxu0 0.0
        %533 = vmatpush1.msra.mxu0 0.0
        %534 = vmatprep.subr.mxu0 0.0
        %535 = vmatpush1.msra.mxu0 0.0
        %536 = vmatprep.subr.mxu0 0.0
        %537 = vmatpush1.msra.mxu0 0.0
        %538 = vmatprep.subr.mxu0 0.0
        %539 = vmatpush1.msra.mxu0 0.0
        %540 = vmatprep.subr.mxu0 0.0
        %541 = vmatpush1.msra.mxu0 0.0
        %542 = vmatprep.subr.mxu0 0.0
        %543 = vmatpush1.msra.mxu0 0.0
        %544 = vmatprep.subr.mxu0 0.0
        %545 = vmatpush1.msra.mxu0 0.0
        %546 = vmatprep.subr.mxu0 0.0
        %547 = vmatpush1.msra.mxu0 0.0
        %548 = vmatprep.subr.mxu0 0.0
        %549 = vmatpush1.msra.mxu0 0.0
        %550 = vmatprep.subr.mxu0 0.0
        %551 = vmatpush1.msra.mxu0 0.0
        %552 = vmatprep.subr.mxu0 0.0
        %553 = vmatpush1.msra.mxu0 %v289
        %554 = vmatprep.subr.mxu0 0.0
        %555 = vmatpush1.msra.mxu0 %v288
        %556 = vmatprep.subr.mxu0 0.0
        %557 = vmatpush2.msra.mxu0 0.0
        %558 = vmatprep.subr.mxu0 0.0
        %559 = vmatpush2.msra.mxu0 0.0
        %560 = vmatprep.subr.mxu0 0.0
        %561 = vmatpush2.msra.mxu0 0.0
        %562 = vmatprep.subr.mxu0 0.0
        %563 = vmatpush2.msra.mxu0 0.0
        %564 = vmatprep.subr.mxu0 0.0
        %565 = vmatpush2.msra.mxu0 0.0
        %566 = vmatprep.subr.mxu0 0.0
        %567 = vmatpush2.msra.mxu0 0.0
        %568 = vmatprep.subr.mxu0 0.0
        %569 = vmatpush2.msra.mxu0 0.0
        %570 = vmatprep.subr.mxu0 0.0
        %571 = vmatpush2.msra.mxu0 0.0
        %572 = vmatprep.subr.mxu0 0.0
        %573 = vmatpush2.msra.mxu0 0.0
        %574 = vmatprep.subr.mxu0 0.0
        %575 = vmatpush2.msra.mxu0 0.0
        %576 = vmatprep.subr.mxu0 0.0
        %577 = vmatpush2.msra.mxu0 0.0
        %578 = vmatprep.subr.mxu0 0.0
        %579 = vmatpush2.msra.mxu0 0.0
        %580 = vmatprep.subr.mxu0 0.0
        %581 = vmatpush2.msra.mxu0 0.0
        %582 = vmatprep.subr.mxu0 0.0
        %583 = vmatpush2.msra.mxu0 0.0
        %584 = vmatprep.subr.mxu0 0.0
        %585 = vmatpush2.msra.mxu0 0.0
        %586 = vmatprep.subr.mxu0 0.0
        %587 = vmatpush2.msra.mxu0 0.0
        %588 = vmatprep.mubr.f32.mxu0 0.0
        %589 = vmatmul.mubr.f32.gmra.mxu0 %v522
        %v590 = vpop.f32.mrf.mxu0
        %v591 = vadd.f32 0.0, %v590
        %v592 = vpop.f32.mrf.mxu0
        %593 = vdwg.mxu0
        %594 = vrot.lane.b32.xlu0 %v510, 32
        %v595 = vpop.permute.xlu0 %594
        %v596 = vsel %vm301, %v595, 0
        %598 = vmatprep.subr.mxu0 0.0
        %599 = vmatpush1.msra.mxu0 0.0
        %600 = vmatprep.subr.mxu0 0.0
        %601 = vmatpush1.msra.mxu0 0.0
        %602 = vmatprep.subr.mxu0 0.0
        %603 = vmatpush1.msra.mxu0 0.0
        %604 = vmatprep.subr.mxu0 0.0
        %605 = vmatpush1.msra.mxu0 0.0
        %606 = vmatprep.subr.mxu0 0.0
        %607 = vmatpush1.msra.mxu0 0.0
        %608 = vmatprep.subr.mxu0 0.0
        %609 = vmatpush1.msra.mxu0 0.0
        %610 = vmatprep.subr.mxu0 0.0
        %611 = vmatpush1.msra.mxu0 0.0
        %612 = vmatprep.subr.mxu0 0.0
        %613 = vmatpush1.msra.mxu0 0.0
        %614 = vmatprep.subr.mxu0 0.0
        %615 = vmatpush1.msra.mxu0 0.0
        %616 = vmatprep.subr.mxu0 0.0
        %617 = vmatpush1.msra.mxu0 0.0
        %618 = vmatprep.subr.mxu0 0.0
        %619 = vmatpush1.msra.mxu0 0.0
        %620 = vmatprep.subr.mxu0 0.0
        %621 = vmatpush1.msra.mxu0 0.0
        %622 = vmatprep.subr.mxu0 0.0
        %623 = vmatpush1.msra.mxu0 0.0
        %624 = vmatprep.subr.mxu0 0.0
        %625 = vmatpush1.msra.mxu0 0.0
        %626 = vmatprep.subr.mxu0 0.0
        %627 = vmatpush1.msra.mxu0 %v292
        %628 = vmatprep.subr.mxu0 0.0
        %629 = vmatpush1.msra.mxu0 %v291
        %630 = vmatprep.subr.mxu0 0.0
        %631 = vmatpush2.msra.mxu0 0.0
        %632 = vmatprep.subr.mxu0 0.0
        %633 = vmatpush2.msra.mxu0 0.0
        %634 = vmatprep.subr.mxu0 0.0
        %635 = vmatpush2.msra.mxu0 0.0
        %636 = vmatprep.subr.mxu0 0.0
        %637 = vmatpush2.msra.mxu0 0.0
        %638 = vmatprep.subr.mxu0 0.0
        %639 = vmatpush2.msra.mxu0 0.0
        %640 = vmatprep.subr.mxu0 0.0
        %641 = vmatpush2.msra.mxu0 0.0
        %642 = vmatprep.subr.mxu0 0.0
        %643 = vmatpush2.msra.mxu0 0.0
        %644 = vmatprep.subr.mxu0 0.0
        %645 = vmatpush2.msra.mxu0 0.0
        %646 = vmatprep.subr.mxu0 0.0
        %647 = vmatpush2.msra.mxu0 0.0
        %648 = vmatprep.subr.mxu0 0.0
        %649 = vmatpush2.msra.mxu0 0.0
        %650 = vmatprep.subr.mxu0 0.0
        %651 = vmatpush2.msra.mxu0 0.0
        %652 = vmatprep.subr.mxu0 0.0
        %653 = vmatpush2.msra.mxu0 0.0
        %654 = vmatprep.subr.mxu0 0.0
        %655 = vmatpush2.msra.mxu0 0.0
        %656 = vmatprep.subr.mxu0 0.0
        %657 = vmatpush2.msra.mxu0 0.0
        %658 = vmatprep.subr.mxu0 0.0
        %659 = vmatpush2.msra.mxu0 0.0
        %660 = vmatprep.subr.mxu0 0.0
        %661 = vmatpush2.msra.mxu0 0.0
        %662 = vmatprep.mubr.f32.mxu0 0.0
        %663 = vmatmul.mubr.f32.gmra.mxu0 %v596
        %v664 = vpop.f32.mrf.mxu0
        %v665 = vadd.f32 0.0, %v664
        %v666 = vpop.f32.mrf.mxu0
        %667 = vdwg.mxu0
        %v668 = vld [vmem:[%s218 + $0x2] sm:$0x3]
        %v669 = vadd.f32 %v668, %v591
        %671 = vrot.lane.b32.xlu0 %v665, 64
        %v672 = vpop.permute.xlu0 %671
        %v674 = vadd.f32 %v668, %v672
        %v675 = vxor.u32 %v669, 2147483648
        %v676 = vmul.f32 %v675, 1.442695
        %v677 = vpow.pop %v676
        %v678 = vadd.f32 %v677, 1.0
        %v679 = vrcp.pop %v678
        %v680 = vmul.f32 1.0, %v679
        %v681 = vxor.u32 %v674, 2147483648
        %v682 = vmul.f32 %v681, 1.442695
        %v683 = vpow.pop %v682
        %v684 = vadd.f32 %v683, 1.0
        %v685 = vrcp.pop %v684
        %v686 = vmul.f32 1.0, %v685
        %v687 = vtanh.pop %v669
        %v688 = vtanh.pop %v674
        %v689 = vmul.f32 %v680, %v483
        %691 = vrot.lane.b32.xlu0 %v687, 80
        %v692 = vpop.permute.xlu0 %691
        %v694 = vmul.f32 %v680, %v692
        %696 = vrot.lane.b32.xlu0 %v694, 16
        %v697 = vpop.permute.xlu0 %696
        %v699 = vadd.f32 %v689, %v697
        %v700 = vmul.f32 %v686, %v498
        %702 = vrot.lane.b32.xlu0 %v688, 80
        %v703 = vpop.permute.xlu0 %702
        %v705 = vmul.f32 %v686, %v703
        %707 = vrot.lane.b32.xlu0 %v705, 16
        %v708 = vpop.permute.xlu0 %707
        %v710 = vadd.f32 %v700, %v708
        %v711 = vtanh.pop %v699
        %713 = vrot.lane.b32.xlu0 %v711, 16
        %v714 = vpop.permute.xlu0 %713
        %v716 = vmul.f32 %v680, %v714
        %v717 = vtanh.pop %v710
        %719 = vrot.lane.b32.xlu0 %v717, 16
        %v720 = vpop.permute.xlu0 %719
        %v722 = vmul.f32 %v686, %v720
        %724 = vrot.lane.b32.xlu0 %v716, 96
        %v725 = vpop.permute.xlu0 %724
        %728 = vrot.lane.b32.xlu0 %v722, 48
        %v729 = vpop.permute.xlu0 %728
        %v731 = vsel %vm301, %v725, %v729
        %732 = vst.msk [vmem:[%s224 + $0x2] sm:$0x3] %vm520, %v731
        %v733 = vsel %vm301, %v725, 0
        %735 = vmatprep.subr.mxu0 0.0
        %736 = vmatpush1.msra.mxu0 0.0
        %737 = vmatprep.subr.mxu0 0.0
        %738 = vmatpush1.msra.mxu0 0.0
        %739 = vmatprep.subr.mxu0 0.0
        %740 = vmatpush1.msra.mxu0 0.0
        %741 = vmatprep.subr.mxu0 0.0
        %742 = vmatpush1.msra.mxu0 0.0
        %743 = vmatprep.subr.mxu0 0.0
        %744 = vmatpush1.msra.mxu0 0.0
        %745 = vmatprep.subr.mxu0 0.0
        %746 = vmatpush1.msra.mxu0 0.0
        %747 = vmatprep.subr.mxu0 0.0
        %748 = vmatpush1.msra.mxu0 0.0
        %749 = vmatprep.subr.mxu0 0.0
        %750 = vmatpush1.msra.mxu0 0.0
        %751 = vmatprep.subr.mxu0 0.0
        %752 = vmatpush1.msra.mxu0 0.0
        %753 = vmatprep.subr.mxu0 0.0
        %754 = vmatpush1.msra.mxu0 0.0
        %755 = vmatprep.subr.mxu0 0.0
        %756 = vmatpush1.msra.mxu0 0.0
        %757 = vmatprep.subr.mxu0 0.0
        %758 = vmatpush1.msra.mxu0 0.0
        %759 = vmatprep.subr.mxu0 0.0
        %760 = vmatpush1.msra.mxu0 0.0
        %761 = vmatprep.subr.mxu0 0.0
        %762 = vmatpush1.msra.mxu0 0.0
        %763 = vmatprep.subr.mxu0 0.0
        %764 = vmatpush1.msra.mxu0 %v289
        %765 = vmatprep.subr.mxu0 0.0
        %766 = vmatpush1.msra.mxu0 %v288
        %767 = vmatprep.subr.mxu0 0.0
        %768 = vmatpush2.msra.mxu0 0.0
        %769 = vmatprep.subr.mxu0 0.0
        %770 = vmatpush2.msra.mxu0 0.0
        %771 = vmatprep.subr.mxu0 0.0
        %772 = vmatpush2.msra.mxu0 0.0
        %773 = vmatprep.subr.mxu0 0.0
        %774 = vmatpush2.msra.mxu0 0.0
        %775 = vmatprep.subr.mxu0 0.0
        %776 = vmatpush2.msra.mxu0 0.0
        %777 = vmatprep.subr.mxu0 0.0
        %778 = vmatpush2.msra.mxu0 0.0
        %779 = vmatprep.subr.mxu0 0.0
        %780 = vmatpush2.msra.mxu0 0.0
        %781 = vmatprep.subr.mxu0 0.0
        %782 = vmatpush2.msra.mxu0 0.0
        %783 = vmatprep.subr.mxu0 0.0
        %784 = vmatpush2.msra.mxu0 0.0
        %785 = vmatprep.subr.mxu0 0.0
        %786 = vmatpush2.msra.mxu0 0.0
        %787 = vmatprep.subr.mxu0 0.0
        %788 = vmatpush2.msra.mxu0 0.0
        %789 = vmatprep.subr.mxu0 0.0
        %790 = vmatpush2.msra.mxu0 0.0
        %791 = vmatprep.subr.mxu0 0.0
        %792 = vmatpush2.msra.mxu0 0.0
        %793 = vmatprep.subr.mxu0 0.0
        %794 = vmatpush2.msra.mxu0 0.0
        %795 = vmatprep.subr.mxu0 0.0
        %796 = vmatpush2.msra.mxu0 0.0
        %797 = vmatprep.subr.mxu0 0.0
        %798 = vmatpush2.msra.mxu0 0.0
        %799 = vmatprep.mubr.f32.mxu0 0.0
        %800 = vmatmul.mubr.f32.gmra.mxu0 %v733
        %v801 = vpop.f32.mrf.mxu0
        %v802 = vadd.f32 0.0, %v801
        %v803 = vpop.f32.mrf.mxu0
        %804 = vdwg.mxu0
        %805 = vrot.lane.b32.xlu0 %v722, 32
        %v806 = vpop.permute.xlu0 %805
        %v807 = vsel %vm301, %v806, 0
        %809 = vmatprep.subr.mxu0 0.0
        %810 = vmatpush1.msra.mxu0 0.0
        %811 = vmatprep.subr.mxu0 0.0
        %812 = vmatpush1.msra.mxu0 0.0
        %813 = vmatprep.subr.mxu0 0.0
        %814 = vmatpush1.msra.mxu0 0.0
        %815 = vmatprep.subr.mxu0 0.0
        %816 = vmatpush1.msra.mxu0 0.0
        %817 = vmatprep.subr.mxu0 0.0
        %818 = vmatpush1.msra.mxu0 0.0
        %819 = vmatprep.subr.mxu0 0.0
        %820 = vmatpush1.msra.mxu0 0.0
        %821 = vmatprep.subr.mxu0 0.0
        %822 = vmatpush1.msra.mxu0 0.0
        %823 = vmatprep.subr.mxu0 0.0
        %824 = vmatpush1.msra.mxu0 0.0
        %825 = vmatprep.subr.mxu0 0.0
        %826 = vmatpush1.msra.mxu0 0.0
        %827 = vmatprep.subr.mxu0 0.0
        %828 = vmatpush1.msra.mxu0 0.0
        %829 = vmatprep.subr.mxu0 0.0
        %830 = vmatpush1.msra.mxu0 0.0
        %831 = vmatprep.subr.mxu0 0.0
        %832 = vmatpush1.msra.mxu0 0.0
        %833 = vmatprep.subr.mxu0 0.0
        %834 = vmatpush1.msra.mxu0 0.0
        %835 = vmatprep.subr.mxu0 0.0
        %836 = vmatpush1.msra.mxu0 0.0
        %837 = vmatprep.subr.mxu0 0.0
        %838 = vmatpush1.msra.mxu0 %v292
        %839 = vmatprep.subr.mxu0 0.0
        %840 = vmatpush1.msra.mxu0 %v291
        %841 = vmatprep.subr.mxu0 0.0
        %842 = vmatpush2.msra.mxu0 0.0
        %843 = vmatprep.subr.mxu0 0.0
        %844 = vmatpush2.msra.mxu0 0.0
        %845 = vmatprep.subr.mxu0 0.0
        %846 = vmatpush2.msra.mxu0 0.0
        %847 = vmatprep.subr.mxu0 0.0
        %848 = vmatpush2.msra.mxu0 0.0
        %849 = vmatprep.subr.mxu0 0.0
        %850 = vmatpush2.msra.mxu0 0.0
        %851 = vmatprep.subr.mxu0 0.0
        %852 = vmatpush2.msra.mxu0 0.0
        %853 = vmatprep.subr.mxu0 0.0
        %854 = vmatpush2.msra.mxu0 0.0
        %855 = vmatprep.subr.mxu0 0.0
        %856 = vmatpush2.msra.mxu0 0.0
        %857 = vmatprep.subr.mxu0 0.0
        %858 = vmatpush2.msra.mxu0 0.0
        %859 = vmatprep.subr.mxu0 0.0
        %860 = vmatpush2.msra.mxu0 0.0
        %861 = vmatprep.subr.mxu0 0.0
        %862 = vmatpush2.msra.mxu0 0.0
        %863 = vmatprep.subr.mxu0 0.0
        %864 = vmatpush2.msra.mxu0 0.0
        %865 = vmatprep.subr.mxu0 0.0
        %866 = vmatpush2.msra.mxu0 0.0
        %867 = vmatprep.subr.mxu0 0.0
        %868 = vmatpush2.msra.mxu0 0.0
        %869 = vmatprep.subr.mxu0 0.0
        %870 = vmatpush2.msra.mxu0 0.0
        %871 = vmatprep.subr.mxu0 0.0
        %872 = vmatpush2.msra.mxu0 0.0
        %873 = vmatprep.mubr.f32.mxu0 0.0
        %874 = vmatmul.mubr.f32.gmra.mxu0 %v807
        %v875 = vpop.f32.mrf.mxu0
        %v876 = vadd.f32 0.0, %v875
        %v877 = vpop.f32.mrf.mxu0
        %878 = vdwg.mxu0
        %v879 = vld [vmem:[%s218 + $0x4] sm:$0x3]
        %v880 = vadd.f32 %v879, %v802
        %882 = vrot.lane.b32.xlu0 %v876, 64
        %v883 = vpop.permute.xlu0 %882
        %v885 = vadd.f32 %v879, %v883
        %v886 = vxor.u32 %v880, 2147483648
        %v887 = vmul.f32 %v886, 1.442695
        %v888 = vpow.pop %v887
        %v889 = vadd.f32 %v888, 1.0
        %v890 = vrcp.pop %v889
        %v891 = vmul.f32 1.0, %v890
        %v892 = vxor.u32 %v885, 2147483648
        %v893 = vmul.f32 %v892, 1.442695
        %v894 = vpow.pop %v893
        %v895 = vadd.f32 %v894, 1.0
        %v896 = vrcp.pop %v895
        %v897 = vmul.f32 1.0, %v896
        %v898 = vtanh.pop %v880
        %v899 = vtanh.pop %v885
        %v900 = vmul.f32 %v891, %v699
        %902 = vrot.lane.b32.xlu0 %v898, 80
        %v903 = vpop.permute.xlu0 %902
        %v905 = vmul.f32 %v891, %v903
        %907 = vrot.lane.b32.xlu0 %v905, 16
        %v908 = vpop.permute.xlu0 %907
        %v910 = vadd.f32 %v900, %v908
        %v911 = vmul.f32 %v897, %v710
        %913 = vrot.lane.b32.xlu0 %v899, 80
        %v914 = vpop.permute.xlu0 %913
        %v916 = vmul.f32 %v897, %v914
        %918 = vrot.lane.b32.xlu0 %v916, 16
        %v919 = vpop.permute.xlu0 %918
        %v921 = vadd.f32 %v911, %v919
        %v922 = vtanh.pop %v910
        %924 = vrot.lane.b32.xlu0 %v922, 16
        %v925 = vpop.permute.xlu0 %924
        %v927 = vmul.f32 %v891, %v925
        %v928 = vtanh.pop %v921
        %930 = vrot.lane.b32.xlu0 %v928, 16
        %v931 = vpop.permute.xlu0 %930
        %v933 = vmul.f32 %v897, %v931
        %935 = vrot.lane.b32.xlu0 %v927, 96
        %v936 = vpop.permute.xlu0 %935
        %939 = vrot.lane.b32.xlu0 %v933, 48
        %v940 = vpop.permute.xlu0 %939
        %v942 = vsel %vm301, %v936, %v940
        %943 = vst.msk [vmem:[%s224 + $0x4] sm:$0x3] %vm520, %v942
        %v944 = vsel %vm301, %v936, 0
        %946 = vmatprep.subr.mxu0 0.0
        %947 = vmatpush1.msra.mxu0 0.0
        %948 = vmatprep.subr.mxu0 0.0
        %949 = vmatpush1.msra.mxu0 0.0
        %950 = vmatprep.subr.mxu0 0.0
        %951 = vmatpush1.msra.mxu0 0.0
        %952 = vmatprep.subr.mxu0 0.0
        %953 = vmatpush1.msra.mxu0 0.0
        %954 = vmatprep.subr.mxu0 0.0
        %955 = vmatpush1.msra.mxu0 0.0
        %956 = vmatprep.subr.mxu0 0.0
        %957 = vmatpush1.msra.mxu0 0.0
        %958 = vmatprep.subr.mxu0 0.0
        %959 = vmatpush1.msra.mxu0 0.0
        %960 = vmatprep.subr.mxu0 0.0
        %961 = vmatpush1.msra.mxu0 0.0
        %962 = vmatprep.subr.mxu0 0.0
        %963 = vmatpush1.msra.mxu0 0.0
        %964 = vmatprep.subr.mxu0 0.0
        %965 = vmatpush1.msra.mxu0 0.0
        %966 = vmatprep.subr.mxu0 0.0
        %967 = vmatpush1.msra.mxu0 0.0
        %968 = vmatprep.subr.mxu0 0.0
        %969 = vmatpush1.msra.mxu0 0.0
        %970 = vmatprep.subr.mxu0 0.0
        %971 = vmatpush1.msra.mxu0 0.0
        %972 = vmatprep.subr.mxu0 0.0
        %973 = vmatpush1.msra.mxu0 0.0
        %974 = vmatprep.subr.mxu0 0.0
        %975 = vmatpush1.msra.mxu0 %v289
        %976 = vmatprep.subr.mxu0 0.0
        %977 = vmatpush1.msra.mxu0 %v288
        %978 = vmatprep.subr.mxu0 0.0
        %979 = vmatpush2.msra.mxu0 0.0
        %980 = vmatprep.subr.mxu0 0.0
        %981 = vmatpush2.msra.mxu0 0.0
        %982 = vmatprep.subr.mxu0 0.0
        %983 = vmatpush2.msra.mxu0 0.0
        %984 = vmatprep.subr.mxu0 0.0
        %985 = vmatpush2.msra.mxu0 0.0
        %986 = vmatprep.subr.mxu0 0.0
        %987 = vmatpush2.msra.mxu0 0.0
        %988 = vmatprep.subr.mxu0 0.0
        %989 = vmatpush2.msra.mxu0 0.0
        %990 = vmatprep.subr.mxu0 0.0
        %991 = vmatpush2.msra.mxu0 0.0
        %992 = vmatprep.subr.mxu0 0.0
        %993 = vmatpush2.msra.mxu0 0.0
        %994 = vmatprep.subr.mxu0 0.0
        %995 = vmatpush2.msra.mxu0 0.0
        %996 = vmatprep.subr.mxu0 0.0
        %997 = vmatpush2.msra.mxu0 0.0
        %998 = vmatprep.subr.mxu0 0.0
        %999 = vmatpush2.msra.mxu0 0.0
        %1000 = vmatprep.subr.mxu0 0.0
        %1001 = vmatpush2.msra.mxu0 0.0
        %1002 = vmatprep.subr.mxu0 0.0
        %1003 = vmatpush2.msra.mxu0 0.0
        %1004 = vmatprep.subr.mxu0 0.0
        %1005 = vmatpush2.msra.mxu0 0.0
        %1006 = vmatprep.subr.mxu0 0.0
        %1007 = vmatpush2.msra.mxu0 0.0
        %1008 = vmatprep.subr.mxu0 0.0
        %1009 = vmatpush2.msra.mxu0 0.0
        %1010 = vmatprep.mubr.f32.mxu0 0.0
        %1011 = vmatmul.mubr.f32.gmra.mxu0 %v944
        %v1012 = vpop.f32.mrf.mxu0
        %v1013 = vadd.f32 0.0, %v1012
        %v1014 = vpop.f32.mrf.mxu0
        %1015 = vdwg.mxu0
        %1016 = vrot.lane.b32.xlu0 %v933, 32
        %v1017 = vpop.permute.xlu0 %1016
        %v1018 = vsel %vm301, %v1017, 0
        %1020 = vmatprep.subr.mxu0 0.0
        %1021 = vmatpush1.msra.mxu0 0.0
        %1022 = vmatprep.subr.mxu0 0.0
        %1023 = vmatpush1.msra.mxu0 0.0
        %1024 = vmatprep.subr.mxu0 0.0
        %1025 = vmatpush1.msra.mxu0 0.0
        %1026 = vmatprep.subr.mxu0 0.0
        %1027 = vmatpush1.msra.mxu0 0.0
        %1028 = vmatprep.subr.mxu0 0.0
        %1029 = vmatpush1.msra.mxu0 0.0
        %1030 = vmatprep.subr.mxu0 0.0
        %1031 = vmatpush1.msra.mxu0 0.0
        %1032 = vmatprep.subr.mxu0 0.0
        %1033 = vmatpush1.msra.mxu0 0.0
        %1034 = vmatprep.subr.mxu0 0.0
        %1035 = vmatpush1.msra.mxu0 0.0
        %1036 = vmatprep.subr.mxu0 0.0
        %1037 = vmatpush1.msra.mxu0 0.0
        %1038 = vmatprep.subr.mxu0 0.0
        %1039 = vmatpush1.msra.mxu0 0.0
        %1040 = vmatprep.subr.mxu0 0.0
        %1041 = vmatpush1.msra.mxu0 0.0
        %1042 = vmatprep.subr.mxu0 0.0
        %1043 = vmatpush1.msra.mxu0 0.0
        %1044 = vmatprep.subr.mxu0 0.0
        %1045 = vmatpush1.msra.mxu0 0.0
        %1046 = vmatprep.subr.mxu0 0.0
        %1047 = vmatpush1.msra.mxu0 0.0
        %1048 = vmatprep.subr.mxu0 0.0
        %1049 = vmatpush1.msra.mxu0 %v292
        %1050 = vmatprep.subr.mxu0 0.0
        %1051 = vmatpush1.msra.mxu0 %v291
        %1052 = vmatprep.subr.mxu0 0.0
        %1053 = vmatpush2.msra.mxu0 0.0
        %1054 = vmatprep.subr.mxu0 0.0
        %1055 = vmatpush2.msra.mxu0 0.0
        %1056 = vmatprep.subr.mxu0 0.0
        %1057 = vmatpush2.msra.mxu0 0.0
        %1058 = vmatprep.subr.mxu0 0.0
        %1059 = vmatpush2.msra.mxu0 0.0
        %1060 = vmatprep.subr.mxu0 0.0
        %1061 = vmatpush2.msra.mxu0 0.0
        %1062 = vmatprep.subr.mxu0 0.0
        %1063 = vmatpush2.msra.mxu0 0.0
        %1064 = vmatprep.subr.mxu0 0.0
        %1065 = vmatpush2.msra.mxu0 0.0
        %1066 = vmatprep.subr.mxu0 0.0
        %1067 = vmatpush2.msra.mxu0 0.0
        %1068 = vmatprep.subr.mxu0 0.0
        %1069 = vmatpush2.msra.mxu0 0.0
        %1070 = vmatprep.subr.mxu0 0.0
        %1071 = vmatpush2.msra.mxu0 0.0
        %1072 = vmatprep.subr.mxu0 0.0
        %1073 = vmatpush2.msra.mxu0 0.0
        %1074 = vmatprep.subr.mxu0 0.0
        %1075 = vmatpush2.msra.mxu0 0.0
        %1076 = vmatprep.subr.mxu0 0.0
        %1077 = vmatpush2.msra.mxu0 0.0
        %1078 = vmatprep.subr.mxu0 0.0
        %1079 = vmatpush2.msra.mxu0 0.0
        %1080 = vmatprep.subr.mxu0 0.0
        %1081 = vmatpush2.msra.mxu0 0.0
        %1082 = vmatprep.subr.mxu0 0.0
        %1083 = vmatpush2.msra.mxu0 0.0
        %1084 = vmatprep.mubr.f32.mxu0 0.0
        %1085 = vmatmul.mubr.f32.gmra.mxu0 %v1018
        %v1086 = vpop.f32.mrf.mxu0
        %v1087 = vadd.f32 0.0, %v1086
        %v1088 = vpop.f32.mrf.mxu0
        %1089 = vdwg.mxu0
        %v1090 = vld [vmem:[%s218 + $0x6] sm:$0x3]
        %v1091 = vadd.f32 %v1090, %v1013
        %1093 = vrot.lane.b32.xlu0 %v1087, 64
        %v1094 = vpop.permute.xlu0 %1093
        %v1096 = vadd.f32 %v1090, %v1094
        %v1097 = vxor.u32 %v1091, 2147483648
        %v1098 = vmul.f32 %v1097, 1.442695
        %v1099 = vpow.pop %v1098
        %v1100 = vadd.f32 %v1099, 1.0
        %v1101 = vrcp.pop %v1100
        %v1102 = vmul.f32 1.0, %v1101
        %v1103 = vxor.u32 %v1096, 2147483648
        %v1104 = vmul.f32 %v1103, 1.442695
        %v1105 = vpow.pop %v1104
        %v1106 = vadd.f32 %v1105, 1.0
        %v1107 = vrcp.pop %v1106
        %v1108 = vmul.f32 1.0, %v1107
        %v1109 = vtanh.pop %v1091
        %v1110 = vtanh.pop %v1096
        %v1111 = vmul.f32 %v1102, %v910
        %1113 = vrot.lane.b32.xlu0 %v1109, 80
        %v1114 = vpop.permute.xlu0 %1113
        %v1116 = vmul.f32 %v1102, %v1114
        %1118 = vrot.lane.b32.xlu0 %v1116, 16
        %v1119 = vpop.permute.xlu0 %1118
        %v1121 = vadd.f32 %v1111, %v1119
        %v1122 = vmul.f32 %v1108, %v921
        %1124 = vrot.lane.b32.xlu0 %v1110, 80
        %v1125 = vpop.permute.xlu0 %1124
        %v1127 = vmul.f32 %v1108, %v1125
        %1129 = vrot.lane.b32.xlu0 %v1127, 16
        %v1130 = vpop.permute.xlu0 %1129
        %v1132 = vadd.f32 %v1122, %v1130
        %v1133 = vtanh.pop %v1121
        %1135 = vrot.lane.b32.xlu0 %v1133, 16
        %v1136 = vpop.permute.xlu0 %1135
        %v1138 = vmul.f32 %v1102, %v1136
        %v1139 = vtanh.pop %v1132
        %1141 = vrot.lane.b32.xlu0 %v1139, 16
        %v1142 = vpop.permute.xlu0 %1141
        %v1144 = vmul.f32 %v1108, %v1142
        %1146 = vrot.lane.b32.xlu0 %v1138, 96
        %v1147 = vpop.permute.xlu0 %1146
        %1150 = vrot.lane.b32.xlu0 %v1144, 48
        %v1151 = vpop.permute.xlu0 %1150
        %v1153 = vsel %vm301, %v1147, %v1151
        %1154 = vst.msk [vmem:[%s224 + $0x6] sm:$0x3] %vm520, %v1153
        %v1155 = vsel %vm301, %v1147, 0
        %1157 = vmatprep.subr.mxu0 0.0
        %1158 = vmatpush1.msra.mxu0 0.0
        %1159 = vmatprep.subr.mxu0 0.0
        %1160 = vmatpush1.msra.mxu0 0.0
        %1161 = vmatprep.subr.mxu0 0.0
        %1162 = vmatpush1.msra.mxu0 0.0
        %1163 = vmatprep.subr.mxu0 0.0
        %1164 = vmatpush1.msra.mxu0 0.0
        %1165 = vmatprep.subr.mxu0 0.0
        %1166 = vmatpush1.msra.mxu0 0.0
        %1167 = vmatprep.subr.mxu0 0.0
        %1168 = vmatpush1.msra.mxu0 0.0
        %1169 = vmatprep.subr.mxu0 0.0
        %1170 = vmatpush1.msra.mxu0 0.0
        %1171 = vmatprep.subr.mxu0 0.0
        %1172 = vmatpush1.msra.mxu0 0.0
        %1173 = vmatprep.subr.mxu0 0.0
        %1174 = vmatpush1.msra.mxu0 0.0
        %1175 = vmatprep.subr.mxu0 0.0
        %1176 = vmatpush1.msra.mxu0 0.0
        %1177 = vmatprep.subr.mxu0 0.0
        %1178 = vmatpush1.msra.mxu0 0.0
        %1179 = vmatprep.subr.mxu0 0.0
        %1180 = vmatpush1.msra.mxu0 0.0
        %1181 = vmatprep.subr.mxu0 0.0
        %1182 = vmatpush1.msra.mxu0 0.0
        %1183 = vmatprep.subr.mxu0 0.0
        %1184 = vmatpush1.msra.mxu0 0.0
        %1185 = vmatprep.subr.mxu0 0.0
        %1186 = vmatpush1.msra.mxu0 %v289
        %1187 = vmatprep.subr.mxu0 0.0
        %1188 = vmatpush1.msra.mxu0 %v288
        %1189 = vmatprep.subr.mxu0 0.0
        %1190 = vmatpush2.msra.mxu0 0.0
        %1191 = vmatprep.subr.mxu0 0.0
        %1192 = vmatpush2.msra.mxu0 0.0
        %1193 = vmatprep.subr.mxu0 0.0
        %1194 = vmatpush2.msra.mxu0 0.0
        %1195 = vmatprep.subr.mxu0 0.0
        %1196 = vmatpush2.msra.mxu0 0.0
        %1197 = vmatprep.subr.mxu0 0.0
        %1198 = vmatpush2.msra.mxu0 0.0
        %1199 = vmatprep.subr.mxu0 0.0
        %1200 = vmatpush2.msra.mxu0 0.0
        %1201 = vmatprep.subr.mxu0 0.0
        %1202 = vmatpush2.msra.mxu0 0.0
        %1203 = vmatprep.subr.mxu0 0.0
        %1204 = vmatpush2.msra.mxu0 0.0
        %1205 = vmatprep.subr.mxu0 0.0
        %1206 = vmatpush2.msra.mxu0 0.0
        %1207 = vmatprep.subr.mxu0 0.0
        %1208 = vmatpush2.msra.mxu0 0.0
        %1209 = vmatprep.subr.mxu0 0.0
        %1210 = vmatpush2.msra.mxu0 0.0
        %1211 = vmatprep.subr.mxu0 0.0
        %1212 = vmatpush2.msra.mxu0 0.0
        %1213 = vmatprep.subr.mxu0 0.0
        %1214 = vmatpush2.msra.mxu0 0.0
        %1215 = vmatprep.subr.mxu0 0.0
        %1216 = vmatpush2.msra.mxu0 0.0
        %1217 = vmatprep.subr.mxu0 0.0
        %1218 = vmatpush2.msra.mxu0 0.0
        %1219 = vmatprep.subr.mxu0 0.0
        %1220 = vmatpush2.msra.mxu0 0.0
        %1221 = vmatprep.mubr.f32.mxu0 0.0
        %1222 = vmatmul.mubr.f32.gmra.mxu0 %v1155
        %v1223 = vpop.f32.mrf.mxu0
        %v1224 = vadd.f32 0.0, %v1223
        %v1225 = vpop.f32.mrf.mxu0
        %1226 = vdwg.mxu0
        %1227 = vrot.lane.b32.xlu0 %v1144, 32
        %v1228 = vpop.permute.xlu0 %1227
        %v1229 = vsel %vm301, %v1228, 0
        %1231 = vmatprep.subr.mxu0 0.0
        %1232 = vmatpush1.msra.mxu0 0.0
        %1233 = vmatprep.subr.mxu0 0.0
        %1234 = vmatpush1.msra.mxu0 0.0
        %1235 = vmatprep.subr.mxu0 0.0
        %1236 = vmatpush1.msra.mxu0 0.0
        %1237 = vmatprep.subr.mxu0 0.0
        %1238 = vmatpush1.msra.mxu0 0.0
        %1239 = vmatprep.subr.mxu0 0.0
        %1240 = vmatpush1.msra.mxu0 0.0
        %1241 = vmatprep.subr.mxu0 0.0
        %1242 = vmatpush1.msra.mxu0 0.0
        %1243 = vmatprep.subr.mxu0 0.0
        %1244 = vmatpush1.msra.mxu0 0.0
        %1245 = vmatprep.subr.mxu0 0.0
        %1246 = vmatpush1.msra.mxu0 0.0
        %1247 = vmatprep.subr.mxu0 0.0
        %1248 = vmatpush1.msra.mxu0 0.0
        %1249 = vmatprep.subr.mxu0 0.0
        %1250 = vmatpush1.msra.mxu0 0.0
        %1251 = vmatprep.subr.mxu0 0.0
        %1252 = vmatpush1.msra.mxu0 0.0
        %1253 = vmatprep.subr.mxu0 0.0
        %1254 = vmatpush1.msra.mxu0 0.0
        %1255 = vmatprep.subr.mxu0 0.0
        %1256 = vmatpush1.msra.mxu0 0.0
        %1257 = vmatprep.subr.mxu0 0.0
        %1258 = vmatpush1.msra.mxu0 0.0
        %1259 = vmatprep.subr.mxu0 0.0
        %1260 = vmatpush1.msra.mxu0 %v292
        %1261 = vmatprep.subr.mxu0 0.0
        %1262 = vmatpush1.msra.mxu0 %v291
        %1263 = vmatprep.subr.mxu0 0.0
        %1264 = vmatpush2.msra.mxu0 0.0
        %1265 = vmatprep.subr.mxu0 0.0
        %1266 = vmatpush2.msra.mxu0 0.0
        %1267 = vmatprep.subr.mxu0 0.0
        %1268 = vmatpush2.msra.mxu0 0.0
        %1269 = vmatprep.subr.mxu0 0.0
        %1270 = vmatpush2.msra.mxu0 0.0
        %1271 = vmatprep.subr.mxu0 0.0
        %1272 = vmatpush2.msra.mxu0 0.0
        %1273 = vmatprep.subr.mxu0 0.0
        %1274 = vmatpush2.msra.mxu0 0.0
        %1275 = vmatprep.subr.mxu0 0.0
        %1276 = vmatpush2.msra.mxu0 0.0
        %1277 = vmatprep.subr.mxu0 0.0
        %1278 = vmatpush2.msra.mxu0 0.0
        %1279 = vmatprep.subr.mxu0 0.0
        %1280 = vmatpush2.msra.mxu0 0.0
        %1281 = vmatprep.subr.mxu0 0.0
        %1282 = vmatpush2.msra.mxu0 0.0
        %1283 = vmatprep.subr.mxu0 0.0
        %1284 = vmatpush2.msra.mxu0 0.0
        %1285 = vmatprep.subr.mxu0 0.0
        %1286 = vmatpush2.msra.mxu0 0.0
        %1287 = vmatprep.subr.mxu0 0.0
        %1288 = vmatpush2.msra.mxu0 0.0
        %1289 = vmatprep.subr.mxu0 0.0
        %1290 = vmatpush2.msra.mxu0 0.0
        %1291 = vmatprep.subr.mxu0 0.0
        %1292 = vmatpush2.msra.mxu0 0.0
        %1293 = vmatprep.subr.mxu0 0.0
        %1294 = vmatpush2.msra.mxu0 0.0
        %1295 = vmatprep.mubr.f32.mxu0 0.0
        %1296 = vmatmul.mubr.f32.gmra.mxu0 %v1229
        %v1297 = vpop.f32.mrf.mxu0
        %v1298 = vadd.f32 0.0, %v1297
        %v1299 = vpop.f32.mrf.mxu0
        %1300 = vdwg.mxu0
        %v1301 = vld [vmem:[%s218 + $0x8] sm:$0x3]
        %v1302 = vadd.f32 %v1301, %v1224
        %1304 = vrot.lane.b32.xlu0 %v1298, 64
        %v1305 = vpop.permute.xlu0 %1304
        %v1307 = vadd.f32 %v1301, %v1305
        %v1308 = vxor.u32 %v1302, 2147483648
        %v1309 = vmul.f32 %v1308, 1.442695
        %v1310 = vpow.pop %v1309
        %v1311 = vadd.f32 %v1310, 1.0
        %v1312 = vrcp.pop %v1311
        %v1313 = vmul.f32 1.0, %v1312
        %v1314 = vxor.u32 %v1307, 2147483648
        %v1315 = vmul.f32 %v1314, 1.442695
        %v1316 = vpow.pop %v1315
        %v1317 = vadd.f32 %v1316, 1.0
        %v1318 = vrcp.pop %v1317
        %v1319 = vmul.f32 1.0, %v1318
        %v1320 = vtanh.pop %v1302
        %v1321 = vtanh.pop %v1307
        %v1322 = vmul.f32 %v1313, %v1121
        %1324 = vrot.lane.b32.xlu0 %v1320, 80
        %v1325 = vpop.permute.xlu0 %1324
        %v1327 = vmul.f32 %v1313, %v1325
        %1329 = vrot.lane.b32.xlu0 %v1327, 16
        %v1330 = vpop.permute.xlu0 %1329
        %v1332 = vadd.f32 %v1322, %v1330
        %v1333 = vmul.f32 %v1319, %v1132
        %1335 = vrot.lane.b32.xlu0 %v1321, 80
        %v1336 = vpop.permute.xlu0 %1335
        %v1338 = vmul.f32 %v1319, %v1336
        %1340 = vrot.lane.b32.xlu0 %v1338, 16
        %v1341 = vpop.permute.xlu0 %1340
        %v1343 = vadd.f32 %v1333, %v1341
        %v1344 = vtanh.pop %v1332
        %1346 = vrot.lane.b32.xlu0 %v1344, 16
        %v1347 = vpop.permute.xlu0 %1346
        %v1349 = vmul.f32 %v1313, %v1347
        %v1350 = vtanh.pop %v1343
        %1352 = vrot.lane.b32.xlu0 %v1350, 16
        %v1353 = vpop.permute.xlu0 %1352
        %v1355 = vmul.f32 %v1319, %v1353
        %1357 = vrot.lane.b32.xlu0 %v1349, 96
        %v1358 = vpop.permute.xlu0 %1357
        %1361 = vrot.lane.b32.xlu0 %v1355, 48
        %v1362 = vpop.permute.xlu0 %1361
        %v1364 = vsel %vm301, %v1358, %v1362
        %1365 = vst.msk [vmem:[%s224 + $0x8] sm:$0x3] %vm520, %v1364
        %v1366 = vsel %vm301, %v1358, 0
        %1368 = vmatprep.subr.mxu0 0.0
        %1369 = vmatpush1.msra.mxu0 0.0
        %1370 = vmatprep.subr.mxu0 0.0
        %1371 = vmatpush1.msra.mxu0 0.0
        %1372 = vmatprep.subr.mxu0 0.0
        %1373 = vmatpush1.msra.mxu0 0.0
        %1374 = vmatprep.subr.mxu0 0.0
        %1375 = vmatpush1.msra.mxu0 0.0
        %1376 = vmatprep.subr.mxu0 0.0
        %1377 = vmatpush1.msra.mxu0 0.0
        %1378 = vmatprep.subr.mxu0 0.0
        %1379 = vmatpush1.msra.mxu0 0.0
        %1380 = vmatprep.subr.mxu0 0.0
        %1381 = vmatpush1.msra.mxu0 0.0
        %1382 = vmatprep.subr.mxu0 0.0
        %1383 = vmatpush1.msra.mxu0 0.0
        %1384 = vmatprep.subr.mxu0 0.0
        %1385 = vmatpush1.msra.mxu0 0.0
        %1386 = vmatprep.subr.mxu0 0.0
        %1387 = vmatpush1.msra.mxu0 0.0
        %1388 = vmatprep.subr.mxu0 0.0
        %1389 = vmatpush1.msra.mxu0 0.0
        %1390 = vmatprep.subr.mxu0 0.0
        %1391 = vmatpush1.msra.mxu0 0.0
        %1392 = vmatprep.subr.mxu0 0.0
        %1393 = vmatpush1.msra.mxu0 0.0
        %1394 = vmatprep.subr.mxu0 0.0
        %1395 = vmatpush1.msra.mxu0 0.0
        %1396 = vmatprep.subr.mxu0 0.0
        %1397 = vmatpush1.msra.mxu0 %v289
        %1398 = vmatprep.subr.mxu0 0.0
        %1399 = vmatpush1.msra.mxu0 %v288
        %1400 = vmatprep.subr.mxu0 0.0
        %1401 = vmatpush2.msra.mxu0 0.0
        %1402 = vmatprep.subr.mxu0 0.0
        %1403 = vmatpush2.msra.mxu0 0.0
        %1404 = vmatprep.subr.mxu0 0.0
        %1405 = vmatpush2.msra.mxu0 0.0
        %1406 = vmatprep.subr.mxu0 0.0
        %1407 = vmatpush2.msra.mxu0 0.0
        %1408 = vmatprep.subr.mxu0 0.0
        %1409 = vmatpush2.msra.mxu0 0.0
        %1410 = vmatprep.subr.mxu0 0.0
        %1411 = vmatpush2.msra.mxu0 0.0
        %1412 = vmatprep.subr.mxu0 0.0
        %1413 = vmatpush2.msra.mxu0 0.0
        %1414 = vmatprep.subr.mxu0 0.0
        %1415 = vmatpush2.msra.mxu0 0.0
        %1416 = vmatprep.subr.mxu0 0.0
        %1417 = vmatpush2.msra.mxu0 0.0
        %1418 = vmatprep.subr.mxu0 0.0
        %1419 = vmatpush2.msra.mxu0 0.0
        %1420 = vmatprep.subr.mxu0 0.0
        %1421 = vmatpush2.msra.mxu0 0.0
        %1422 = vmatprep.subr.mxu0 0.0
        %1423 = vmatpush2.msra.mxu0 0.0
        %1424 = vmatprep.subr.mxu0 0.0
        %1425 = vmatpush2.msra.mxu0 0.0
        %1426 = vmatprep.subr.mxu0 0.0
        %1427 = vmatpush2.msra.mxu0 0.0
        %1428 = vmatprep.subr.mxu0 0.0
        %1429 = vmatpush2.msra.mxu0 0.0
        %1430 = vmatprep.subr.mxu0 0.0
        %1431 = vmatpush2.msra.mxu0 0.0
        %1432 = vmatprep.mubr.f32.mxu0 0.0
        %1433 = vmatmul.mubr.f32.gmra.mxu0 %v1366
        %v1434 = vpop.f32.mrf.mxu0
        %v1435 = vadd.f32 0.0, %v1434
        %v1436 = vpop.f32.mrf.mxu0
        %1437 = vdwg.mxu0
        %1438 = vrot.lane.b32.xlu0 %v1355, 32
        %v1439 = vpop.permute.xlu0 %1438
        %v1440 = vsel %vm301, %v1439, 0
        %1442 = vmatprep.subr.mxu0 0.0
        %1443 = vmatpush1.msra.mxu0 0.0
        %1444 = vmatprep.subr.mxu0 0.0
        %1445 = vmatpush1.msra.mxu0 0.0
        %1446 = vmatprep.subr.mxu0 0.0
        %1447 = vmatpush1.msra.mxu0 0.0
        %1448 = vmatprep.subr.mxu0 0.0
        %1449 = vmatpush1.msra.mxu0 0.0
        %1450 = vmatprep.subr.mxu0 0.0
        %1451 = vmatpush1.msra.mxu0 0.0
        %1452 = vmatprep.subr.mxu0 0.0
        %1453 = vmatpush1.msra.mxu0 0.0
        %1454 = vmatprep.subr.mxu0 0.0
        %1455 = vmatpush1.msra.mxu0 0.0
        %1456 = vmatprep.subr.mxu0 0.0
        %1457 = vmatpush1.msra.mxu0 0.0
        %1458 = vmatprep.subr.mxu0 0.0
        %1459 = vmatpush1.msra.mxu0 0.0
        %1460 = vmatprep.subr.mxu0 0.0
        %1461 = vmatpush1.msra.mxu0 0.0
        %1462 = vmatprep.subr.mxu0 0.0
        %1463 = vmatpush1.msra.mxu0 0.0
        %1464 = vmatprep.subr.mxu0 0.0
        %1465 = vmatpush1.msra.mxu0 0.0
        %1466 = vmatprep.subr.mxu0 0.0
        %1467 = vmatpush1.msra.mxu0 0.0
        %1468 = vmatprep.subr.mxu0 0.0
        %1469 = vmatpush1.msra.mxu0 0.0
        %1470 = vmatprep.subr.mxu0 0.0
        %1471 = vmatpush1.msra.mxu0 %v292
        %1472 = vmatprep.subr.mxu0 0.0
        %1473 = vmatpush1.msra.mxu0 %v291
        %1474 = vmatprep.subr.mxu0 0.0
        %1475 = vmatpush2.msra.mxu0 0.0
        %1476 = vmatprep.subr.mxu0 0.0
        %1477 = vmatpush2.msra.mxu0 0.0
        %1478 = vmatprep.subr.mxu0 0.0
        %1479 = vmatpush2.msra.mxu0 0.0
        %1480 = vmatprep.subr.mxu0 0.0
        %1481 = vmatpush2.msra.mxu0 0.0
        %1482 = vmatprep.subr.mxu0 0.0
        %1483 = vmatpush2.msra.mxu0 0.0
        %1484 = vmatprep.subr.mxu0 0.0
        %1485 = vmatpush2.msra.mxu0 0.0
        %1486 = vmatprep.subr.mxu0 0.0
        %1487 = vmatpush2.msra.mxu0 0.0
        %1488 = vmatprep.subr.mxu0 0.0
        %1489 = vmatpush2.msra.mxu0 0.0
        %1490 = vmatprep.subr.mxu0 0.0
        %1491 = vmatpush2.msra.mxu0 0.0
        %1492 = vmatprep.subr.mxu0 0.0
        %1493 = vmatpush2.msra.mxu0 0.0
        %1494 = vmatprep.subr.mxu0 0.0
        %1495 = vmatpush2.msra.mxu0 0.0
        %1496 = vmatprep.subr.mxu0 0.0
        %1497 = vmatpush2.msra.mxu0 0.0
        %1498 = vmatprep.subr.mxu0 0.0
        %1499 = vmatpush2.msra.mxu0 0.0
        %1500 = vmatprep.subr.mxu0 0.0
        %1501 = vmatpush2.msra.mxu0 0.0
        %1502 = vmatprep.subr.mxu0 0.0
        %1503 = vmatpush2.msra.mxu0 0.0
        %1504 = vmatprep.subr.mxu0 0.0
        %1505 = vmatpush2.msra.mxu0 0.0
        %1506 = vmatprep.mubr.f32.mxu0 0.0
        %1507 = vmatmul.mubr.f32.gmra.mxu0 %v1440
        %v1508 = vpop.f32.mrf.mxu0
        %v1509 = vadd.f32 0.0, %v1508
        %v1510 = vpop.f32.mrf.mxu0
        %1511 = vdwg.mxu0
        %v1512 = vld [vmem:[%s218 + $0xa] sm:$0x3]
        %v1513 = vadd.f32 %v1512, %v1435
        %1515 = vrot.lane.b32.xlu0 %v1509, 64
        %v1516 = vpop.permute.xlu0 %1515
        %v1518 = vadd.f32 %v1512, %v1516
        %v1519 = vxor.u32 %v1513, 2147483648
        %v1520 = vmul.f32 %v1519, 1.442695
        %v1521 = vpow.pop %v1520
        %v1522 = vadd.f32 %v1521, 1.0
        %v1523 = vrcp.pop %v1522
        %v1524 = vmul.f32 1.0, %v1523
        %v1525 = vxor.u32 %v1518, 2147483648
        %v1526 = vmul.f32 %v1525, 1.442695
        %v1527 = vpow.pop %v1526
        %v1528 = vadd.f32 %v1527, 1.0
        %v1529 = vrcp.pop %v1528
        %v1530 = vmul.f32 1.0, %v1529
        %v1531 = vtanh.pop %v1513
        %v1532 = vtanh.pop %v1518
        %v1533 = vmul.f32 %v1524, %v1332
        %1535 = vrot.lane.b32.xlu0 %v1531, 80
        %v1536 = vpop.permute.xlu0 %1535
        %v1538 = vmul.f32 %v1524, %v1536
        %1540 = vrot.lane.b32.xlu0 %v1538, 16
        %v1541 = vpop.permute.xlu0 %1540
        %v1543 = vadd.f32 %v1533, %v1541
        %v1544 = vmul.f32 %v1530, %v1343
        %1546 = vrot.lane.b32.xlu0 %v1532, 80
        %v1547 = vpop.permute.xlu0 %1546
        %v1549 = vmul.f32 %v1530, %v1547
        %1551 = vrot.lane.b32.xlu0 %v1549, 16
        %v1552 = vpop.permute.xlu0 %1551
        %v1554 = vadd.f32 %v1544, %v1552
        %v1555 = vtanh.pop %v1543
        %1557 = vrot.lane.b32.xlu0 %v1555, 16
        %v1558 = vpop.permute.xlu0 %1557
        %v1560 = vmul.f32 %v1524, %v1558
        %v1561 = vtanh.pop %v1554
        %1563 = vrot.lane.b32.xlu0 %v1561, 16
        %v1564 = vpop.permute.xlu0 %1563
        %v1566 = vmul.f32 %v1530, %v1564
        %1568 = vrot.lane.b32.xlu0 %v1560, 96
        %v1569 = vpop.permute.xlu0 %1568
        %1572 = vrot.lane.b32.xlu0 %v1566, 48
        %v1573 = vpop.permute.xlu0 %1572
        %v1575 = vsel %vm301, %v1569, %v1573
        %1576 = vst.msk [vmem:[%s224 + $0xa] sm:$0x3] %vm520, %v1575
        %v1577 = vsel %vm301, %v1569, 0
        %1579 = vmatprep.subr.mxu0 0.0
        %1580 = vmatpush1.msra.mxu0 0.0
        %1581 = vmatprep.subr.mxu0 0.0
        %1582 = vmatpush1.msra.mxu0 0.0
        %1583 = vmatprep.subr.mxu0 0.0
        %1584 = vmatpush1.msra.mxu0 0.0
        %1585 = vmatprep.subr.mxu0 0.0
        %1586 = vmatpush1.msra.mxu0 0.0
        %1587 = vmatprep.subr.mxu0 0.0
        %1588 = vmatpush1.msra.mxu0 0.0
        %1589 = vmatprep.subr.mxu0 0.0
        %1590 = vmatpush1.msra.mxu0 0.0
        %1591 = vmatprep.subr.mxu0 0.0
        %1592 = vmatpush1.msra.mxu0 0.0
        %1593 = vmatprep.subr.mxu0 0.0
        %1594 = vmatpush1.msra.mxu0 0.0
        %1595 = vmatprep.subr.mxu0 0.0
        %1596 = vmatpush1.msra.mxu0 0.0
        %1597 = vmatprep.subr.mxu0 0.0
        %1598 = vmatpush1.msra.mxu0 0.0
        %1599 = vmatprep.subr.mxu0 0.0
        %1600 = vmatpush1.msra.mxu0 0.0
        %1601 = vmatprep.subr.mxu0 0.0
        %1602 = vmatpush1.msra.mxu0 0.0
        %1603 = vmatprep.subr.mxu0 0.0
        %1604 = vmatpush1.msra.mxu0 0.0
        %1605 = vmatprep.subr.mxu0 0.0
        %1606 = vmatpush1.msra.mxu0 0.0
        %1607 = vmatprep.subr.mxu0 0.0
        %1608 = vmatpush1.msra.mxu0 %v289
        %1609 = vmatprep.subr.mxu0 0.0
        %1610 = vmatpush1.msra.mxu0 %v288
        %1611 = vmatprep.subr.mxu0 0.0
        %1612 = vmatpush2.msra.mxu0 0.0
        %1613 = vmatprep.subr.mxu0 0.0
        %1614 = vmatpush2.msra.mxu0 0.0
        %1615 = vmatprep.subr.mxu0 0.0
        %1616 = vmatpush2.msra.mxu0 0.0
        %1617 = vmatprep.subr.mxu0 0.0
        %1618 = vmatpush2.msra.mxu0 0.0
        %1619 = vmatprep.subr.mxu0 0.0
        %1620 = vmatpush2.msra.mxu0 0.0
        %1621 = vmatprep.subr.mxu0 0.0
        %1622 = vmatpush2.msra.mxu0 0.0
        %1623 = vmatprep.subr.mxu0 0.0
        %1624 = vmatpush2.msra.mxu0 0.0
        %1625 = vmatprep.subr.mxu0 0.0
        %1626 = vmatpush2.msra.mxu0 0.0
        %1627 = vmatprep.subr.mxu0 0.0
        %1628 = vmatpush2.msra.mxu0 0.0
        %1629 = vmatprep.subr.mxu0 0.0
        %1630 = vmatpush2.msra.mxu0 0.0
        %1631 = vmatprep.subr.mxu0 0.0
        %1632 = vmatpush2.msra.mxu0 0.0
        %1633 = vmatprep.subr.mxu0 0.0
        %1634 = vmatpush2.msra.mxu0 0.0
        %1635 = vmatprep.subr.mxu0 0.0
        %1636 = vmatpush2.msra.mxu0 0.0
        %1637 = vmatprep.subr.mxu0 0.0
        %1638 = vmatpush2.msra.mxu0 0.0
        %1639 = vmatprep.subr.mxu0 0.0
        %1640 = vmatpush2.msra.mxu0 0.0
        %1641 = vmatprep.subr.mxu0 0.0
        %1642 = vmatpush2.msra.mxu0 0.0
        %1643 = vmatprep.mubr.f32.mxu0 0.0
        %1644 = vmatmul.mubr.f32.gmra.mxu0 %v1577
        %v1645 = vpop.f32.mrf.mxu0
        %v1646 = vadd.f32 0.0, %v1645
        %v1647 = vpop.f32.mrf.mxu0
        %1648 = vdwg.mxu0
        %1649 = vrot.lane.b32.xlu0 %v1566, 32
        %v1650 = vpop.permute.xlu0 %1649
        %v1651 = vsel %vm301, %v1650, 0
        %1653 = vmatprep.subr.mxu0 0.0
        %1654 = vmatpush1.msra.mxu0 0.0
        %1655 = vmatprep.subr.mxu0 0.0
        %1656 = vmatpush1.msra.mxu0 0.0
        %1657 = vmatprep.subr.mxu0 0.0
        %1658 = vmatpush1.msra.mxu0 0.0
        %1659 = vmatprep.subr.mxu0 0.0
        %1660 = vmatpush1.msra.mxu0 0.0
        %1661 = vmatprep.subr.mxu0 0.0
        %1662 = vmatpush1.msra.mxu0 0.0
        %1663 = vmatprep.subr.mxu0 0.0
        %1664 = vmatpush1.msra.mxu0 0.0
        %1665 = vmatprep.subr.mxu0 0.0
        %1666 = vmatpush1.msra.mxu0 0.0
        %1667 = vmatprep.subr.mxu0 0.0
        %1668 = vmatpush1.msra.mxu0 0.0
        %1669 = vmatprep.subr.mxu0 0.0
        %1670 = vmatpush1.msra.mxu0 0.0
        %1671 = vmatprep.subr.mxu0 0.0
        %1672 = vmatpush1.msra.mxu0 0.0
        %1673 = vmatprep.subr.mxu0 0.0
        %1674 = vmatpush1.msra.mxu0 0.0
        %1675 = vmatprep.subr.mxu0 0.0
        %1676 = vmatpush1.msra.mxu0 0.0
        %1677 = vmatprep.subr.mxu0 0.0
        %1678 = vmatpush1.msra.mxu0 0.0
        %1679 = vmatprep.subr.mxu0 0.0
        %1680 = vmatpush1.msra.mxu0 0.0
        %1681 = vmatprep.subr.mxu0 0.0
        %1682 = vmatpush1.msra.mxu0 %v292
        %1683 = vmatprep.subr.mxu0 0.0
        %1684 = vmatpush1.msra.mxu0 %v291
        %1685 = vmatprep.subr.mxu0 0.0
        %1686 = vmatpush2.msra.mxu0 0.0
        %1687 = vmatprep.subr.mxu0 0.0
        %1688 = vmatpush2.msra.mxu0 0.0
        %1689 = vmatprep.subr.mxu0 0.0
        %1690 = vmatpush2.msra.mxu0 0.0
        %1691 = vmatprep.subr.mxu0 0.0
        %1692 = vmatpush2.msra.mxu0 0.0
        %1693 = vmatprep.subr.mxu0 0.0
        %1694 = vmatpush2.msra.mxu0 0.0
        %1695 = vmatprep.subr.mxu0 0.0
        %1696 = vmatpush2.msra.mxu0 0.0
        %1697 = vmatprep.subr.mxu0 0.0
        %1698 = vmatpush2.msra.mxu0 0.0
        %1699 = vmatprep.subr.mxu0 0.0
        %1700 = vmatpush2.msra.mxu0 0.0
        %1701 = vmatprep.subr.mxu0 0.0
        %1702 = vmatpush2.msra.mxu0 0.0
        %1703 = vmatprep.subr.mxu0 0.0
        %1704 = vmatpush2.msra.mxu0 0.0
        %1705 = vmatprep.subr.mxu0 0.0
        %1706 = vmatpush2.msra.mxu0 0.0
        %1707 = vmatprep.subr.mxu0 0.0
        %1708 = vmatpush2.msra.mxu0 0.0
        %1709 = vmatprep.subr.mxu0 0.0
        %1710 = vmatpush2.msra.mxu0 0.0
        %1711 = vmatprep.subr.mxu0 0.0
        %1712 = vmatpush2.msra.mxu0 0.0
        %1713 = vmatprep.subr.mxu0 0.0
        %1714 = vmatpush2.msra.mxu0 0.0
        %1715 = vmatprep.subr.mxu0 0.0
        %1716 = vmatpush2.msra.mxu0 0.0
        %1717 = vmatprep.mubr.f32.mxu0 0.0
        %1718 = vmatmul.mubr.f32.gmra.mxu0 %v1651
        %v1719 = vpop.f32.mrf.mxu0
        %v1720 = vadd.f32 0.0, %v1719
        %v1721 = vpop.f32.mrf.mxu0
        %1722 = vdwg.mxu0
        %v1723 = vld [vmem:[%s218 + $0xc] sm:$0x3]
        %v1724 = vadd.f32 %v1723, %v1646
        %1726 = vrot.lane.b32.xlu0 %v1720, 64
        %v1727 = vpop.permute.xlu0 %1726
        %v1729 = vadd.f32 %v1723, %v1727
        %v1730 = vxor.u32 %v1724, 2147483648
        %v1731 = vmul.f32 %v1730, 1.442695
        %v1732 = vpow.pop %v1731
        %v1733 = vadd.f32 %v1732, 1.0
        %v1734 = vrcp.pop %v1733
        %v1735 = vmul.f32 1.0, %v1734
        %v1736 = vxor.u32 %v1729, 2147483648
        %v1737 = vmul.f32 %v1736, 1.442695
        %v1738 = vpow.pop %v1737
        %v1739 = vadd.f32 %v1738, 1.0
        %v1740 = vrcp.pop %v1739
        %v1741 = vmul.f32 1.0, %v1740
        %v1742 = vtanh.pop %v1724
        %v1743 = vtanh.pop %v1729
        %v1744 = vmul.f32 %v1735, %v1543
        %1746 = vrot.lane.b32.xlu0 %v1742, 80
        %v1747 = vpop.permute.xlu0 %1746
        %v1749 = vmul.f32 %v1735, %v1747
        %1751 = vrot.lane.b32.xlu0 %v1749, 16
        %v1752 = vpop.permute.xlu0 %1751
        %v1754 = vadd.f32 %v1744, %v1752
        %v1755 = vmul.f32 %v1741, %v1554
        %1757 = vrot.lane.b32.xlu0 %v1743, 80
        %v1758 = vpop.permute.xlu0 %1757
        %v1760 = vmul.f32 %v1741, %v1758
        %1762 = vrot.lane.b32.xlu0 %v1760, 16
        %v1763 = vpop.permute.xlu0 %1762
        %v1765 = vadd.f32 %v1755, %v1763
        %v1766 = vtanh.pop %v1754
        %1768 = vrot.lane.b32.xlu0 %v1766, 16
        %v1769 = vpop.permute.xlu0 %1768
        %v1771 = vmul.f32 %v1735, %v1769
        %v1772 = vtanh.pop %v1765
        %1774 = vrot.lane.b32.xlu0 %v1772, 16
        %v1775 = vpop.permute.xlu0 %1774
        %v1777 = vmul.f32 %v1741, %v1775
        %1779 = vrot.lane.b32.xlu0 %v1771, 96
        %v1780 = vpop.permute.xlu0 %1779
        %1783 = vrot.lane.b32.xlu0 %v1777, 48
        %v1784 = vpop.permute.xlu0 %1783
        %v1786 = vsel %vm301, %v1780, %v1784
        %1787 = vst.msk [vmem:[%s224 + $0xc] sm:$0x3] %vm520, %v1786
        %v1788 = vsel %vm301, %v1780, 0
        %1790 = vmatprep.subr.mxu0 0.0
        %1791 = vmatpush1.msra.mxu0 0.0
        %1792 = vmatprep.subr.mxu0 0.0
        %1793 = vmatpush1.msra.mxu0 0.0
        %1794 = vmatprep.subr.mxu0 0.0
        %1795 = vmatpush1.msra.mxu0 0.0
        %1796 = vmatprep.subr.mxu0 0.0
        %1797 = vmatpush1.msra.mxu0 0.0
        %1798 = vmatprep.subr.mxu0 0.0
        %1799 = vmatpush1.msra.mxu0 0.0
        %1800 = vmatprep.subr.mxu0 0.0
        %1801 = vmatpush1.msra.mxu0 0.0
        %1802 = vmatprep.subr.mxu0 0.0
        %1803 = vmatpush1.msra.mxu0 0.0
        %1804 = vmatprep.subr.mxu0 0.0
        %1805 = vmatpush1.msra.mxu0 0.0
        %1806 = vmatprep.subr.mxu0 0.0
        %1807 = vmatpush1.msra.mxu0 0.0
        %1808 = vmatprep.subr.mxu0 0.0
        %1809 = vmatpush1.msra.mxu0 0.0
        %1810 = vmatprep.subr.mxu0 0.0
        %1811 = vmatpush1.msra.mxu0 0.0
        %1812 = vmatprep.subr.mxu0 0.0
        %1813 = vmatpush1.msra.mxu0 0.0
        %1814 = vmatprep.subr.mxu0 0.0
        %1815 = vmatpush1.msra.mxu0 0.0
        %1816 = vmatprep.subr.mxu0 0.0
        %1817 = vmatpush1.msra.mxu0 0.0
        %1818 = vmatprep.subr.mxu0 0.0
        %1819 = vmatpush1.msra.mxu0 %v289
        %1820 = vmatprep.subr.mxu0 0.0
        %1821 = vmatpush1.msra.mxu0 %v288
        %1822 = vmatprep.subr.mxu0 0.0
        %1823 = vmatpush2.msra.mxu0 0.0
        %1824 = vmatprep.subr.mxu0 0.0
        %1825 = vmatpush2.msra.mxu0 0.0
        %1826 = vmatprep.subr.mxu0 0.0
        %1827 = vmatpush2.msra.mxu0 0.0
        %1828 = vmatprep.subr.mxu0 0.0
        %1829 = vmatpush2.msra.mxu0 0.0
        %1830 = vmatprep.subr.mxu0 0.0
        %1831 = vmatpush2.msra.mxu0 0.0
        %1832 = vmatprep.subr.mxu0 0.0
        %1833 = vmatpush2.msra.mxu0 0.0
        %1834 = vmatprep.subr.mxu0 0.0
        %1835 = vmatpush2.msra.mxu0 0.0
        %1836 = vmatprep.subr.mxu0 0.0
        %1837 = vmatpush2.msra.mxu0 0.0
        %1838 = vmatprep.subr.mxu0 0.0
        %1839 = vmatpush2.msra.mxu0 0.0
        %1840 = vmatprep.subr.mxu0 0.0
        %1841 = vmatpush2.msra.mxu0 0.0
        %1842 = vmatprep.subr.mxu0 0.0
        %1843 = vmatpush2.msra.mxu0 0.0
        %1844 = vmatprep.subr.mxu0 0.0
        %1845 = vmatpush2.msra.mxu0 0.0
        %1846 = vmatprep.subr.mxu0 0.0
        %1847 = vmatpush2.msra.mxu0 0.0
        %1848 = vmatprep.subr.mxu0 0.0
        %1849 = vmatpush2.msra.mxu0 0.0
        %1850 = vmatprep.subr.mxu0 0.0
        %1851 = vmatpush2.msra.mxu0 0.0
        %1852 = vmatprep.subr.mxu0 0.0
        %1853 = vmatpush2.msra.mxu0 0.0
        %1854 = vmatprep.mubr.f32.mxu0 0.0
        %1855 = vmatmul.mubr.f32.gmra.mxu0 %v1788
        %v1856 = vpop.f32.mrf.mxu0
        %v1857 = vadd.f32 0.0, %v1856
        %v1858 = vpop.f32.mrf.mxu0
        %1859 = vdwg.mxu0
        %1860 = vrot.lane.b32.xlu0 %v1777, 32
        %v1861 = vpop.permute.xlu0 %1860
        %v1862 = vsel %vm301, %v1861, 0
        %1864 = vmatprep.subr.mxu0 0.0
        %1865 = vmatpush1.msra.mxu0 0.0
        %1866 = vmatprep.subr.mxu0 0.0
        %1867 = vmatpush1.msra.mxu0 0.0
        %1868 = vmatprep.subr.mxu0 0.0
        %1869 = vmatpush1.msra.mxu0 0.0
        %1870 = vmatprep.subr.mxu0 0.0
        %1871 = vmatpush1.msra.mxu0 0.0
        %1872 = vmatprep.subr.mxu0 0.0
        %1873 = vmatpush1.msra.mxu0 0.0
        %1874 = vmatprep.subr.mxu0 0.0
        %1875 = vmatpush1.msra.mxu0 0.0
        %1876 = vmatprep.subr.mxu0 0.0
        %1877 = vmatpush1.msra.mxu0 0.0
        %1878 = vmatprep.subr.mxu0 0.0
        %1879 = vmatpush1.msra.mxu0 0.0
        %1880 = vmatprep.subr.mxu0 0.0
        %1881 = vmatpush1.msra.mxu0 0.0
        %1882 = vmatprep.subr.mxu0 0.0
        %1883 = vmatpush1.msra.mxu0 0.0
        %1884 = vmatprep.subr.mxu0 0.0
        %1885 = vmatpush1.msra.mxu0 0.0
        %1886 = vmatprep.subr.mxu0 0.0
        %1887 = vmatpush1.msra.mxu0 0.0
        %1888 = vmatprep.subr.mxu0 0.0
        %1889 = vmatpush1.msra.mxu0 0.0
        %1890 = vmatprep.subr.mxu0 0.0
        %1891 = vmatpush1.msra.mxu0 0.0
        %1892 = vmatprep.subr.mxu0 0.0
        %1893 = vmatpush1.msra.mxu0 %v292
        %1894 = vmatprep.subr.mxu0 0.0
        %1895 = vmatpush1.msra.mxu0 %v291
        %1896 = vmatprep.subr.mxu0 0.0
        %1897 = vmatpush2.msra.mxu0 0.0
        %1898 = vmatprep.subr.mxu0 0.0
        %1899 = vmatpush2.msra.mxu0 0.0
        %1900 = vmatprep.subr.mxu0 0.0
        %1901 = vmatpush2.msra.mxu0 0.0
        %1902 = vmatprep.subr.mxu0 0.0
        %1903 = vmatpush2.msra.mxu0 0.0
        %1904 = vmatprep.subr.mxu0 0.0
        %1905 = vmatpush2.msra.mxu0 0.0
        %1906 = vmatprep.subr.mxu0 0.0
        %1907 = vmatpush2.msra.mxu0 0.0
        %1908 = vmatprep.subr.mxu0 0.0
        %1909 = vmatpush2.msra.mxu0 0.0
        %1910 = vmatprep.subr.mxu0 0.0
        %1911 = vmatpush2.msra.mxu0 0.0
        %1912 = vmatprep.subr.mxu0 0.0
        %1913 = vmatpush2.msra.mxu0 0.0
        %1914 = vmatprep.subr.mxu0 0.0
        %1915 = vmatpush2.msra.mxu0 0.0
        %1916 = vmatprep.subr.mxu0 0.0
        %1917 = vmatpush2.msra.mxu0 0.0
        %1918 = vmatprep.subr.mxu0 0.0
        %1919 = vmatpush2.msra.mxu0 0.0
        %1920 = vmatprep.subr.mxu0 0.0
        %1921 = vmatpush2.msra.mxu0 0.0
        %1922 = vmatprep.subr.mxu0 0.0
        %1923 = vmatpush2.msra.mxu0 0.0
        %1924 = vmatprep.subr.mxu0 0.0
        %1925 = vmatpush2.msra.mxu0 0.0
        %1926 = vmatprep.subr.mxu0 0.0
        %1927 = vmatpush2.msra.mxu0 0.0
        %1928 = vmatprep.mubr.f32.mxu0 0.0
        %1929 = vmatmul.mubr.f32.gmra.mxu0 %v1862
        %v1930 = vpop.f32.mrf.mxu0
        %v1931 = vadd.f32 0.0, %v1930
        %v1932 = vpop.f32.mrf.mxu0
        %1933 = vdwg.mxu0
        %v1934 = vld [vmem:[%s218 + $0xe] sm:$0x3]
        %v1935 = vadd.f32 %v1934, %v1857
        %1937 = vrot.lane.b32.xlu0 %v1931, 64
        %v1938 = vpop.permute.xlu0 %1937
        %v1940 = vadd.f32 %v1934, %v1938
        %v1941 = vxor.u32 %v1935, 2147483648
        %v1942 = vmul.f32 %v1941, 1.442695
        %v1943 = vpow.pop %v1942
        %v1944 = vadd.f32 %v1943, 1.0
        %v1945 = vrcp.pop %v1944
        %v1946 = vmul.f32 1.0, %v1945
        %v1947 = vxor.u32 %v1940, 2147483648
        %v1948 = vmul.f32 %v1947, 1.442695
        %v1949 = vpow.pop %v1948
        %v1950 = vadd.f32 %v1949, 1.0
        %v1951 = vrcp.pop %v1950
        %v1952 = vmul.f32 1.0, %v1951
        %v1953 = vtanh.pop %v1935
        %v1954 = vtanh.pop %v1940
        %v1955 = vmul.f32 %v1946, %v1754
        %1957 = vrot.lane.b32.xlu0 %v1953, 80
        %v1958 = vpop.permute.xlu0 %1957
        %v1960 = vmul.f32 %v1946, %v1958
        %1962 = vrot.lane.b32.xlu0 %v1960, 16
        %v1963 = vpop.permute.xlu0 %1962
        %v1965 = vadd.f32 %v1955, %v1963
        %v1966 = vmul.f32 %v1952, %v1765
        %1968 = vrot.lane.b32.xlu0 %v1954, 80
        %v1969 = vpop.permute.xlu0 %1968
        %v1971 = vmul.f32 %v1952, %v1969
        %1973 = vrot.lane.b32.xlu0 %v1971, 16
        %v1974 = vpop.permute.xlu0 %1973
        %v1976 = vadd.f32 %v1966, %v1974
        %v1977 = vtanh.pop %v1965
        %1979 = vrot.lane.b32.xlu0 %v1977, 16
        %v1980 = vpop.permute.xlu0 %1979
        %v1982 = vmul.f32 %v1946, %v1980
        %v1983 = vtanh.pop %v1976
        %1985 = vrot.lane.b32.xlu0 %v1983, 16
        %v1986 = vpop.permute.xlu0 %1985
        %v1988 = vmul.f32 %v1952, %v1986
        %1990 = vrot.lane.b32.xlu0 %v1982, 96
        %v1991 = vpop.permute.xlu0 %1990
        %1994 = vrot.lane.b32.xlu0 %v1988, 48
        %v1995 = vpop.permute.xlu0 %1994
        %v1997 = vsel %vm301, %v1991, %v1995
        %1998 = vst.msk [vmem:[%s224 + $0xe] sm:$0x3] %vm520, %v1997
        %vm1999 = vcmask 123904
        %2000 = vst.msk [vmem:[#allocation4] sm:$0x3] %vm1999, %v1991
        %2001 = vrot.lane.b32.xlu0 %v1988, 32
        %v2002 = vpop.permute.xlu0 %2001
        %2004 = vst.msk [vmem:[%s296] sm:$0x3] %vm1999, %v2002
        %2006 = vrot.lane.b32.xlu0 %v1965, 112
        %v2007 = vpop.permute.xlu0 %2006
        %2009 = vst.msk [vmem:[#allocation6] sm:$0x3] %vm1999, %v2007
        %2011 = vrot.lane.b32.xlu0 %v1976, 48
        %v2012 = vpop.permute.xlu0 %2011
        %2014 = vst.msk [vmem:[%s299] sm:$0x3] %vm1999, %v2012
        %v2015 = vld [vmem:[%s224] sm:$0xff]
        %v2016 = vld [vmem:[%s224 + $0x8] sm:$0xff]
        %vm2017 = vcmask 261120
        %v2018 = vsel %vm2017, %v2015, 0.0
        %2019 = vadd.xlane.f32.xlu0 %v2018
        %v2020 = vpop.xlane.xlu0 %2019
        %v2021 = vsel %vm2017, %v2016, 0.0
        %2022 = vadd.xlane.f32.xlu0 %v2021
        %v2023 = vpop.xlane.xlu0 %2022
        %v2024 = vrcp.pop 32.0
        %v2025 = vmul.f32 %v2020, %v2024
        %v2026 = vmul.f32 %v2023, %v2024
        %v2027 = vsub.f32 %v2015, %v2025
        %v2028 = vsub.f32 %v2016, %v2026
        %v2029 = vmul.f32 %v2027, %v2027
        %v2030 = vmul.f32 %v2028, %v2028
        %v2031 = vsel %vm2017, %v2029, 0.0
        %2032 = vadd.xlane.f32.xlu0 %v2031
        %v2033 = vpop.xlane.xlu0 %2032
        %v2034 = vsel %vm2017, %v2030, 0.0
        %2035 = vadd.xlane.f32.xlu0 %v2034
        %v2036 = vpop.xlane.xlu0 %2035
        %v2037 = vmul.f32 %v2033, %v2024
        %v2038 = vmul.f32 %v2036, %v2024
        %v2039 = vadd.f32 %v2037, 1e-05
        %v2040 = vadd.f32 %v2038, 1e-05
        %v2041 = vrsqrt.pop %v2039
        %v2042 = vrsqrt.pop %v2040
        %v2043 = vmul.f32 %v2027, %v2041
        %v2044 = vmul.f32 %v2028, %v2042
        %v2046 = vlaneseq
        %v2047 = vshrl.u32 %v2046, 7
        %v2048 = vsub.s32 0, %v2047
        %v2049 = vrot.slane %v293, %v2048
        %v2051 = vmul.f32 %v2043, %v2049
        %v2052 = vmul.f32 %v2044, %v2049
        %v2054 = vlaneseq
        %v2055 = vshrl.u32 %v2054, 7
        %v2056 = vsub.s32 0, %v2055
        %v2057 = vrot.slane %v294, %v2056
        %v2059 = vadd.f32 %v2051, %v2057
        %v2060 = vadd.f32 %v2052, %v2057
        %2061 = vst.msk [vmem:[%s224] sm:$0xff] %vm2017, %v2059
        %2062 = vst.msk [vmem:[%s224 + $0x8] sm:$0xff] %vm2017, %v2060
        %s2063 = smul.u32 2, %s20
        %p2064 = scmp.lt.s32.totalorder %s2063, 3
        %s2065 = scalar_select %p2064, %s2063, 3
        %s2066 = smul.addr %s2065, 8
        %s2067 = scalar_lea.vmem %s4, %s2066
        // Predicated region
        $region71: #{xlstm_block.1} parent=31 // pred_check
          %p2068 = pneg %p106
        $region72: #{xlstm_block.1} parent=31 // pred_check_branch
          %2070 = sbr.rel (%p2068) target = $region74
        $region73: #{xlstm_block.1} parent=31 // pred_region
          %s2071 = smul.u32 2, %s20
        $region74: #{xlstm_block.1} parent=31 // pred_fallthru
          _
        // Predicated region
        $region75: #{xlstm_block.1} parent=31 // pred_check
          %p2072 = pneg %p127
        $region76: #{xlstm_block.1} parent=31 // pred_check_branch
          %2074 = sbr.rel (%p2072) target = $region78
        $region77: #{xlstm_block.1} parent=31 // pred_region
          %s2076 = ssub.s32 64, 64
          %2077 = vsyncadd [#allocation5], %s2076
          %s2078 = sshll.u32 [#allocation4], 4
          %s2079 = int_to_ptr.vmem [resolvable:$true] %s2078
          %2084 = dma.vmem_to_hbm [thread:$0]  %s2079, 64, %s5, [#allocation5], 32, 32, 2
        $region78: #{xlstm_block.1} parent=31 // pred_fallthru
          _
        // Predicated region
        $region79: #{xlstm_block.1} parent=31 // pred_check
          %p2085 = pneg %p148
        $region80: #{xlstm_block.1} parent=31 // pred_check_branch
          %2087 = sbr.rel (%p2085) target = $region82
        $region81: #{xlstm_block.1} parent=31 // pred_region
          %s2089 = ssub.s32 64, 64
          %2090 = vsyncadd [#allocation7], %s2089
          %s2091 = sshll.u32 [#allocation6], 4
          %s2092 = int_to_ptr.vmem [resolvable:$true] %s2091
          %2097 = dma.vmem_to_hbm [thread:$0]  %s2092, 64, %s6, [#allocation7], 32, 32, 2
        $region82: #{xlstm_block.1} parent=31 // pred_fallthru
          _
        // Predicated region
        $region83: #{xlstm_block.1} parent=31 // pred_check
          %p2098 = pneg %p127
        $region84: #{xlstm_block.1} parent=31 // pred_check_branch
          %2100 = sbr.rel (%p2098) target = $region86
        $region85: #{xlstm_block.1} parent=31 // pred_region
          %2101 = dma.done [#allocation5], 64
        $region86: #{xlstm_block.1} parent=31 // pred_fallthru
          _
        // Predicated region
        $region87: #{xlstm_block.1} parent=31 // pred_check
          %p2102 = pneg %p148
        $region88: #{xlstm_block.1} parent=31 // pred_check_branch
          %2104 = sbr.rel (%p2102) target = $region90
        $region89: #{xlstm_block.1} parent=31 // pred_region
          %2105 = dma.done [#allocation7], 64
        $region90: #{xlstm_block.1} parent=31 // pred_fallthru
          _
      $region32: #{xlstm_block.1} parent=5 // pred_fallthru
        _
      %p2106 = scmp.le.s32.totalorder 2, %s15
      // Predicated region
      $region91: #{xlstm_block.1} parent=5 // pred_check
        %p2107 = pneg %p2106
      $region92: #{xlstm_block.1} parent=5 // pred_check_branch
        %2109 = sbr.rel (%p2107) target = $region94
      $region93: #{xlstm_block.1} parent=5 // pred_region
        %s2110 = ssub.s32 %s15, 2
        // Predicated region
        $region95: #{xlstm_block.1} parent=93 // pred_check
          %p2111 = pneg %p112
        $region96: #{xlstm_block.1} parent=93 // pred_check_branch
          %2113 = sbr.rel (%p2111) target = $region98
        $region97: #{xlstm_block.1} parent=93 // pred_region
          %s2114 = smul.u32 2, %s21
          %p2115 = scmp.lt.s32.totalorder %s2114, 3
          %s2116 = scalar_select %p2115, %s2114, 3
          %s2117 = smul.addr %s2116, 8
          %s2118 = scalar_lea.vmem %s4, %s2117
        $region98: #{xlstm_block.1} parent=93 // pred_fallthru
          _
      $region94: #{xlstm_block.1} parent=5 // pred_fallthru
        _
    $region6: #{xlstm_block.1} parent=1 // loop_footer
      %s19 = sadd.s32 1, %s15
    $region7: #{xlstm_block.1} parent=1 // loop_footer_branch
      %14 = sbr.rel target = $region3
    $region8: #{xlstm_block.1} parent=1 // loop_exit
      _
    %2119 = vsyncpa [#allocation5], 1
    %s2120 = scalar_lea.sflag [#allocation5], 1
    %2121 = vsyncpa %s2120, 1
    %2122 = vsyncpa [#allocation7], 1
  %2123 = vsyncmov [#allocation3]
  %s2124 = vpop.sfrf %2123
  %p2125 = scmp.eq.s32.totalorder %s2124, 0
  %p2126 = pneg %p2125
  %2128 = shalt.err (%p2126)

</llo_original>
